<compile_context>
chip_gen: v7x
topology: tpu7x:2x2x1
jax: 0.10.0
libtpu: 0.0.40
codegen_flags: <defaults>
</compile_context>

<pallas_src>
import jax
import jax.numpy as jnp
from jax.experimental import pallas as pl
from jax.experimental.pallas import tpu as pltpu
from jax.scipy.linalg import solve_triangular

# ---------------- model hyper-parameters (module defaults) ----------------
INPUT_DIM = 6
D = 32              # d_model
H = 2               # nhead
DH = D // H         # 16
DHID = 128          # dim_feedforward
L = 2               # nlayers
N_IND = 16          # inducing points
B = 2               # batch
S = 8               # sequence length
BS = B * S          # 16 flattened rows
LANES = 128
OUT_ROWS = 8        # lane/sublane-dense padded output rows (>= B)
LN_EPS = 1e-5
JITTER = 1e-4

# ---------------- row layout of the single [SLAB_ROWS, 128] parameter slab ----------------
ROW_WPROJ = 0                          # 128 rows: input projection [128, 32] (rows 6.. zero)
ROW_OUTPW = ROW_WPROJ + LANES          # 32 rows : output linear [32, 32]
ROW_ZT = ROW_OUTPW + D                 # 32 rows : inducing points Z^T [32, 128] (lanes 16.. zero)
ROW_AMASK = ROW_ZT + D                 # 16 rows : attention mask [16, 32] (0 / -1e30)
ROW_HEADBLK = ROW_AMASK + BS           # 32 rows : head block-diag ones [32, 32]
ROW_POOL = ROW_HEADBLK + 2 * BS        # 8 rows  : mean-pool matrix [8, 16]
ROW_GVEC = ROW_POOL + OUT_ROWS         # 16 rows of global vectors
#   +0 bproj, +1 outp bias, +2 final ln gamma, +3 final ln beta,
#   +4 |Z_i|^2, +5 alpha', +6 1/ls_m, +7 1/(2 ls_r^2), +8 const_mean*y_std+y_mean
ROW_LAYER0 = ROW_GVEC + 16
OFF_WQ, OFF_WK, OFF_WV, OFF_WO = 0, D, 2 * D, 3 * D
OFF_WFF1 = 4 * D                       # [32, 128]
OFF_WFF2 = OFF_WFF1 + D                # [128, 32]
OFF_LVEC = OFF_WFF2 + DHID             # 16 rows of per-layer vectors
#   +0 bq (scaled), +1 bk, +2 bv, +3 bo, +4 b1(128), +5 b2, +6 ln1g, +7 ln1b, +8 ln2g, +9 ln2b
LAYER_ROWS = OFF_LVEC + 16             # 304
SLAB_ROWS = ROW_LAYER0 + L * LAYER_ROWS  # 872


# ======================= fused Pallas kernel =======================
def fused_kernel(x_ref, slab_ref, out_ref):
    f32 = jnp.float32

    def mat(r0, nrows, ncols):
        return slab_ref[r0:r0 + nrows, 0:ncols]

    def vec(r, ncols=D):
        return slab_ref[r:r + 1, 0:ncols]

    def layernorm(v, g, b):
        mu = jnp.mean(v, axis=-1, keepdims=True)
        var = jnp.mean((v - mu) ** 2, axis=-1, keepdims=True)
        return (v - mu) * jax.lax.rsqrt(var + LN_EPS) * g + b

    amask = mat(ROW_AMASK, BS, 2 * BS)            # [16, 32] 0 / -1e30 (same-batch mask, both heads)
    headblk = mat(ROW_HEADBLK, 2 * BS, 2 * BS)    # [32, 32] block-diag ones (DH == BS == 16 here)

    # ---- input projection (x lane-padded to 128 in glue, weight rows 6.. are zero) ----
    h = jnp.dot(x_ref[...], mat(ROW_WPROJ, LANES, D),
                preferred_element_type=f32) + vec(ROW_GVEC + 0)        # [BS, D]

    for l in range(L):                                                 # static layer loop
        base = ROW_LAYER0 + l * LAYER_ROWS
        lv = base + OFF_LVEC

        # full-width Q/K/V (head0 -> lanes 0:16, head1 -> lanes 16:32); 1/sqrt(dh) folded into Q.
        q = jnp.dot(h, mat(base + OFF_WQ, D, D), preferred_element_type=f32) + vec(lv + 0)
        k = jnp.dot(h, mat(base + OFF_WK, D, D), preferred_element_type=f32) + vec(lv + 1)
        v = jnp.dot(h, mat(base + OFF_WV, D, D), preferred_element_type=f32) + vec(lv + 2)

        # head block-diagonal key/value slabs [2*BS, D]: rows 0:16 keep head0 lanes, 16:32 head1.
        kb = jnp.concatenate([k, k], axis=0) * headblk
        vb = jnp.concatenate([v, v], axis=0) * headblk

        # ONE score matmul for both heads -> [BS, 2*BS]: lanes 0:16 head0, 16:32 head1 scores.
        s = jax.lax.dot_general(q, kb, (((1,), (1,)), ((), ())),
                                preferred_element_type=f32) + amask
        # ONE softmax: shared row max is a valid shift within each head group; per-head
        # denominators via one tiny segment-sum matmul against the block-diag ones matrix.
        s = s - jnp.max(s, axis=-1, keepdims=True)
        e = jnp.exp(s)
        denom = jnp.dot(e, headblk, preferred_element_type=f32)
        p = e * pl.reciprocal(denom, approx=True)
        # ONE PV matmul -> [BS, D] already laid out as [head0 out | head1 out]; ONE out-proj dot.
        ho = jnp.dot(p, vb, preferred_element_type=f32)
        attn = jnp.dot(ho, mat(base + OFF_WO, D, D), preferred_element_type=f32) + vec(lv + 3)
        h = layernorm(h + attn, vec(lv + 6), vec(lv + 7))

        # ---- feed-forward ----
        ff = jnp.dot(h, mat(base + OFF_WFF1, D, DHID),
                     preferred_element_type=f32) + vec(lv + 4, DHID)
        ff = jnp.maximum(ff, 0.0)
        ff = jnp.dot(ff, mat(base + OFF_WFF2, DHID, D), preferred_element_type=f32) + vec(lv + 5)
        h = layernorm(h + ff, vec(lv + 8), vec(lv + 9))

    # ---- mean over sequence (one matmul), output linear, final layernorm ----
    hm = jnp.dot(mat(ROW_POOL, OUT_ROWS, BS), h, preferred_element_type=f32)   # [8, D]
    o = jnp.dot(hm, mat(ROW_OUTPW, D, D), preferred_element_type=f32) + vec(ROW_GVEC + 1)
    z = layernorm(o, vec(ROW_GVEC + 2), vec(ROW_GVEC + 3))                     # [8, D]

    # ---- SVGP predictive mean: ScaleKernel(Matern2.5 + RBF), whitened strategy, 128-lane padded ----
    zz = jnp.dot(z, mat(ROW_ZT, D, LANES), preferred_element_type=f32)         # [8, 128]
    z_sq = jnp.sum(z * z, axis=-1, keepdims=True)                              # [8, 1]
    d2 = jnp.maximum(z_sq + vec(ROW_GVEC + 4, LANES) - 2.0 * zz, 0.0)
    r = jnp.sqrt(d2) * vec(ROW_GVEC + 6, LANES)
    sqrt5 = 5.0 ** 0.5
    k_m = (1.0 + sqrt5 * r + (5.0 / 3.0) * (r * r)) * jnp.exp(-sqrt5 * r)
    k_r = jnp.exp(-d2 * vec(ROW_GVEC + 7, LANES))
    kv = (k_m + k_r) * vec(ROW_GVEC + 5, LANES)          # padded inducing lanes are zero
    pred = jnp.sum(kv, axis=-1, keepdims=True)           # [8, 1]
    # lane-dense [8,128] store (real result = rows 0:B, lane 0, sliced in glue)
    out_ref[...] = jnp.broadcast_to(pred, (OUT_ROWS, LANES)) + vec(ROW_GVEC + 8, LANES)


@jax.jit
def residual_model_svgp_forward(x, slab):
    Bb, Ss, Ff = x.shape
    assert Bb * Ss == BS and Ff == INPUT_DIM
    x_flat = jnp.zeros((Bb * Ss, LANES), jnp.float32).at[:, :Ff].set(
        x.reshape(Bb * Ss, Ff).astype(jnp.float32))
    out = pl.pallas_call(
        fused_kernel,
        out_shape=jax.ShapeDtypeStruct((OUT_ROWS, LANES), jnp.float32),
        in_specs=[pl.BlockSpec(memory_space=pltpu.MemorySpace.VMEM),
                  pl.BlockSpec(memory_space=pltpu.MemorySpace.VMEM)],
        out_specs=pl.BlockSpec(memory_space=pltpu.MemorySpace.VMEM),
    )(x_flat, slab)
    return out[:Bb, 0:1]


# ======================= parameter setup & packing (plain JAX glue) =======================
def k_matern_plus_rbf(x1, x2, ls_m, ls_r):
    d2 = jnp.maximum(jnp.sum(x1 ** 2, -1, keepdims=True)
                     + jnp.sum(x2 ** 2, -1)[None, :] - 2.0 * x1 @ x2.T, 0.0)
    r = jnp.sqrt(d2) / ls_m
    s5 = jnp.sqrt(5.0)
    km = (1.0 + s5 * r + (5.0 / 3.0) * r * r) * jnp.exp(-s5 * r)
    kr = jnp.exp(-d2 / (2.0 * ls_r ** 2))
    return km + kr


def init_raw_params(key):
    ks = jax.random.split(key, 16)
    kit = iter(ks)
    rnd = lambda shape, scale=0.1: (scale * jax.random.normal(next(kit), shape)).astype(jnp.float32)

    p = {}
    p["wproj"] = rnd((INPUT_DIM, D)); p["bproj"] = rnd((D,))
    p["inw"] = rnd((L, D, 3 * D)); p["inb"] = rnd((L, 3 * D))
    p["ow"] = rnd((L, D, D)); p["ob"] = rnd((L, D))
    p["w1"] = rnd((L, D, DHID)); p["b1"] = rnd((L, DHID))
    p["w2"] = rnd((L, DHID, D)); p["b2"] = rnd((L, D))
    p["ln1g"] = jnp.ones((L, D), jnp.float32); p["ln1b"] = jnp.zeros((L, D), jnp.float32)
    p["ln2g"] = jnp.ones((L, D), jnp.float32); p["ln2b"] = jnp.zeros((L, D), jnp.float32)
    p["outpw"] = rnd((D, D)); p["outpb"] = rnd((D,))
    p["fg"] = jnp.ones((D,), jnp.float32); p["fb"] = jnp.zeros((D,), jnp.float32)

    p["Zi"] = jax.random.normal(next(kit), (N_IND, D)).astype(jnp.float32)
    m_var = (0.5 * jax.random.normal(next(kit), (N_IND,))).astype(jnp.float32)
    p["outputscale"], p["ls_m"], p["ls_r"] = 1.0, 1.2, 0.8
    const_mean, y_mean, y_std = 0.1, 0.3, 2.5

    # Whitened variational strategy (parameter-only): alpha = L^-T m, L = chol(K_zz + jitter I).
    # TODO(synk): Cholesky / triangular solve have no Pallas TPU primitive; precomputed in JAX glue.
    K_zz = p["outputscale"] * k_matern_plus_rbf(p["Zi"], p["Zi"], p["ls_m"], p["ls_r"])
    Lc = jnp.linalg.cholesky(K_zz + JITTER * jnp.eye(N_IND, dtype=jnp.float32))
    alpha = solve_triangular(Lc, m_var, lower=True, trans='T')
    p["alpha_scaled"] = (p["outputscale"] * y_std * alpha).astype(jnp.float32)
    p["out_bias"] = const_mean * y_std + y_mean
    return p


def pack_slab(p):
    assert DH == BS and D == 2 * BS   # lets one block-diag matrix serve K/V packing and segment-sum
    slab = jnp.zeros((SLAB_ROWS, LANES), jnp.float32)

    def put(s, r0, arr):
        arr = jnp.asarray(arr, jnp.float32)
        if arr.ndim == 1:
            arr = arr[None, :]
        return s.at[r0:r0 + arr.shape[0], 0:arr.shape[1]].set(arr)

    slab = put(slab, ROW_WPROJ, p["wproj"])                   # rows 6..127 stay zero
    slab = put(slab, ROW_OUTPW, p["outpw"])
    slab = put(slab, ROW_ZT, p["Zi"].T)                       # [32, 16], lanes 16.. zero

    # attention mask [BS, 2*BS]: query i may attend wide-key j iff same batch as key (j % BS)
    qb = jnp.arange(BS) // S
    kcol = (jnp.arange(2 * BS) % BS) // S
    amask = jnp.where(qb[:, None] == kcol[None, :], 0.0, -1e30).astype(jnp.float32)
    slab = put(slab, ROW_AMASK, amask)

    # head block-diagonal ones [2*BS, 2*BS]
    hid = jnp.arange(2 * BS) // BS
    headblk = (hid[:, None] == hid[None, :]).astype(jnp.float32)
    slab = put(slab, ROW_HEADBLK, headblk)

    # mean-pool matrix [OUT_ROWS, BS] (rows >= B are zero)
    rows = jnp.arange(OUT_ROWS)[:, None]
    cols = (jnp.arange(BS) // S)[None, :]
    pool = jnp.where((rows == cols) & (rows < B), 1.0 / S, 0.0).astype(jnp.float32)
    slab = put(slab, ROW_POOL, pool)

    slab = put(slab, ROW_GVEC + 0, p["bproj"])
    slab = put(slab, ROW_GVEC + 1, p["outpb"])
    slab = put(slab, ROW_GVEC + 2, p["fg"])
    slab = put(slab, ROW_GVEC + 3, p["fb"])
    slab = put(slab, ROW_GVEC + 4, jnp.sum(p["Zi"] * p["Zi"], axis=-1))
    slab = put(slab, ROW_GVEC + 5, p["alpha_scaled"])
    slab = put(slab, ROW_GVEC + 6, jnp.full((LANES,), 1.0 / p["ls_m"], jnp.float32))
    slab = put(slab, ROW_GVEC + 7, jnp.full((LANES,), 1.0 / (2.0 * p["ls_r"] ** 2), jnp.float32))
    slab = put(slab, ROW_GVEC + 8, jnp.full((LANES,), p["out_bias"], jnp.float32))

    scale = 1.0 / (DH ** 0.5)                                  # folded into Q weights/bias
    for l in range(L):
        base = ROW_LAYER0 + l * LAYER_ROWS
        slab = put(slab, base + OFF_WQ, p["inw"][l][:, 0:D] * scale)
        slab = put(slab, base + OFF_WK, p["inw"][l][:, D:2 * D])
        slab = put(slab, base + OFF_WV, p["inw"][l][:, 2 * D:3 * D])
        slab = put(slab, base + OFF_WO, p["ow"][l])
        slab = put(slab, base + OFF_WFF1, p["w1"][l])
        slab = put(slab, base + OFF_WFF2, p["w2"][l])
        lv = base + OFF_LVEC
        slab = put(slab, lv + 0, p["inb"][l][0:D] * scale)
        slab = put(slab, lv + 1, p["inb"][l][D:2 * D])
        slab = put(slab, lv + 2, p["inb"][l][2 * D:3 * D])
        slab = put(slab, lv + 3, p["ob"][l])
        slab = put(slab, lv + 4, p["b1"][l])
        slab = put(slab, lv + 5, p["b2"][l])
        slab = put(slab, lv + 6, p["ln1g"][l])
        slab = put(slab, lv + 7, p["ln1b"][l])
        slab = put(slab, lv + 8, p["ln2g"][l])
        slab = put(slab, lv + 9, p["ln2b"][l])
    return slab


# ======================= pure-JAX reference (correctness check) =======================
def reference_forward(x, p):
    def ln(v, g, b):
        mu = v.mean(-1, keepdims=True)
        var = ((v - mu) ** 2).mean(-1, keepdims=True)
        return (v - mu) / jnp.sqrt(var + LN_EPS) * g + b

    Bb, Ss, _ = x.shape
    h = x @ p["wproj"] + p["bproj"]
    for l in range(L):
        q = h @ p["inw"][l][:, 0:D] + p["inb"][l][0:D]
        k = h @ p["inw"][l][:, D:2 * D] + p["inb"][l][D:2 * D]
        v = h @ p["inw"][l][:, 2 * D:] + p["inb"][l][2 * D:]
        qh = q.reshape(Bb, Ss, H, DH).transpose(0, 2, 1, 3)
        kh = k.reshape(Bb, Ss, H, DH).transpose(0, 2, 1, 3)
        vh = v.reshape(Bb, Ss, H, DH).transpose(0, 2, 1, 3)
        sc = jnp.einsum('bhqd,bhkd->bhqk', qh, kh) / jnp.sqrt(float(DH))
        pr = jax.nn.softmax(sc, axis=-1)
        o = jnp.einsum('bhqk,bhkd->bhqd', pr, vh).transpose(0, 2, 1, 3).reshape(Bb, Ss, D)
        attn = o @ p["ow"][l] + p["ob"][l]
        h = ln(h + attn, p["ln1g"][l], p["ln1b"][l])
        ff = jax.nn.relu(h @ p["w1"][l] + p["b1"][l]) @ p["w2"][l] + p["b2"][l]
        h = ln(h + ff, p["ln2g"][l], p["ln2b"][l])
    hm = h.mean(axis=1)
    z = ln(hm @ p["outpw"] + p["outpb"], p["fg"], p["fb"])
    kxz = k_matern_plus_rbf(z, p["Zi"], p["ls_m"], p["ls_r"])
    return (kxz @ p["alpha_scaled"])[:, None] + p["out_bias"]


if __name__ == "__main__":
    key = jax.random.PRNGKey(0)
    k_x, k_p = jax.random.split(key)
    x = jax.random.normal(k_x, (B, S, INPUT_DIM), dtype=jnp.float32)   # [batch, seq, feature]
    raw = init_raw_params(k_p)
    slab = pack_slab(raw)

    out = jax.block_until_ready(residual_model_svgp_forward(x, slab))
    assert out.shape == (B, 1) and out.dtype == jnp.float32
    assert bool(jnp.all(jnp.isfinite(out)))

    ref = reference_forward(x, raw)
    assert bool(jnp.allclose(out, ref, rtol=3e-2, atol=3e-2)), (out, ref)
    print("KERNEL_OK")
</pallas_src>

<mosaic_0001>
module attributes {stable_mosaic.version = 11 : i64} {
  func.func @fused_kernel(%arg0: memref<16x128xf32, #tpu.memory_space<vmem>>, %arg1: memref<872x128xf32, #tpu.memory_space<vmem>>, %arg2: memref<8x128xf32, #tpu.memory_space<vmem>>) attributes {dimension_semantics = [], scalar_prefetch = 0 : i64, scratch_operands = 0 : i64, tpu.core_type = #tpu.core_type<tc>} {
    %c192 = arith.constant 192 : index
    %c0 = arith.constant 0 : index
    %0 = vector.load %arg1[%c192, %c0] : memref<872x128xf32, #tpu.memory_space<vmem>>, vector<16x32xf32>
    %c208 = arith.constant 208 : index
    %c0_0 = arith.constant 0 : index
    %1 = vector.load %arg1[%c208, %c0_0] : memref<872x128xf32, #tpu.memory_space<vmem>>, vector<32x32xf32>
    %c0_1 = arith.constant 0 : index
    %c0_2 = arith.constant 0 : index
    %2 = vector.load %arg0[%c0_1, %c0_2] : memref<16x128xf32, #tpu.memory_space<vmem>>, vector<16x128xf32>
    %c0_3 = arith.constant 0 : index
    %c0_4 = arith.constant 0 : index
    %3 = vector.load %arg1[%c0_3, %c0_4] : memref<872x128xf32, #tpu.memory_space<vmem>>, vector<128x32xf32>
    %cst = arith.constant dense<0.000000e+00> : vector<16x32xf32>
    %4 = tpu.matmul %2, %3, %cst {dimension_numbers = #tpu.dot_dimension_numbers<[1], [0], [0], [1], [0, 0, 1, 1], [], []>} : vector<16x128xf32>, vector<128x32xf32>, vector<16x32xf32> -> vector<16x32xf32>
    %c248 = arith.constant 248 : index
    %c0_5 = arith.constant 0 : index
    %5 = vector.load %arg1[%c248, %c0_5] : memref<872x128xf32, #tpu.memory_space<vmem>>, vector<1x32xf32>
    %6 = vector.broadcast %5 : vector<1x32xf32> to vector<16x32xf32>
    %7 = arith.addf %4, %6 : vector<16x32xf32>
    %c264 = arith.constant 264 : index
    %c0_6 = arith.constant 0 : index
    %8 = vector.load %arg1[%c264, %c0_6] : memref<872x128xf32, #tpu.memory_space<vmem>>, vector<32x32xf32>
    %cst_7 = arith.constant dense<0.000000e+00> : vector<16x32xf32>
    %9 = tpu.matmul %7, %8, %cst_7 {dimension_numbers = #tpu.dot_dimension_numbers<[1], [0], [0], [1], [0, 0, 1, 1], [], []>} : vector<16x32xf32>, vector<32x32xf32>, vector<16x32xf32> -> vector<16x32xf32>
    %c552 = arith.constant 552 : index
    %c0_8 = arith.constant 0 : index
    %10 = vector.load %arg1[%c552, %c0_8] : memref<872x128xf32, #tpu.memory_space<vmem>>, vector<1x32xf32>
    %11 = vector.broadcast %10 : vector<1x32xf32> to vector<16x32xf32>
    %12 = arith.addf %9, %11 : vector<16x32xf32>
    %c296 = arith.constant 296 : index
    %c0_9 = arith.constant 0 : index
    %13 = vector.load %arg1[%c296, %c0_9] : memref<872x128xf32, #tpu.memory_space<vmem>>, vector<32x32xf32>
    %cst_10 = arith.constant dense<0.000000e+00> : vector<16x32xf32>
    %14 = tpu.matmul %7, %13, %cst_10 {dimension_numbers = #tpu.dot_dimension_numbers<[1], [0], [0], [1], [0, 0, 1, 1], [], []>} : vector<16x32xf32>, vector<32x32xf32>, vector<16x32xf32> -> vector<16x32xf32>
    %c553 = arith.constant 553 : index
    %c0_11 = arith.constant 0 : index
    %15 = vector.load %arg1[%c553, %c0_11] : memref<872x128xf32, #tpu.memory_space<vmem>>, vector<1x32xf32>
    %16 = vector.broadcast %15 : vector<1x32xf32> to vector<16x32xf32>
    %17 = arith.addf %14, %16 : vector<16x32xf32>
    %c328 = arith.constant 328 : index
    %c0_12 = arith.constant 0 : index
    %18 = vector.load %arg1[%c328, %c0_12] : memref<872x128xf32, #tpu.memory_space<vmem>>, vector<32x32xf32>
    %cst_13 = arith.constant dense<0.000000e+00> : vector<16x32xf32>
    %19 = tpu.matmul %7, %18, %cst_13 {dimension_numbers = #tpu.dot_dimension_numbers<[1], [0], [0], [1], [0, 0, 1, 1], [], []>} : vector<16x32xf32>, vector<32x32xf32>, vector<16x32xf32> -> vector<16x32xf32>
    %c554 = arith.constant 554 : index
    %c0_14 = arith.constant 0 : index
    %20 = vector.load %arg1[%c554, %c0_14] : memref<872x128xf32, #tpu.memory_space<vmem>>, vector<1x32xf32>
    %21 = vector.broadcast %20 : vector<1x32xf32> to vector<16x32xf32>
    %22 = arith.addf %19, %21 : vector<16x32xf32>
    %23 = tpu.concatenate %17, %17 in 0 : vector<16x32xf32>, vector<16x32xf32> -> vector<32x32xf32>
    %24 = arith.mulf %23, %1 : vector<32x32xf32>
    %25 = tpu.concatenate %22, %22 in 0 : vector<16x32xf32>, vector<16x32xf32> -> vector<32x32xf32>
    %26 = arith.mulf %25, %1 : vector<32x32xf32>
    %cst_15 = arith.constant dense<0.000000e+00> : vector<16x32xf32>
    %27 = tpu.matmul %12, %24, %cst_15 {dimension_numbers = #tpu.dot_dimension_numbers<[1], [1], [0], [0], [0, 0, 1, 0], [], []>} : vector<16x32xf32>, vector<32x32xf32>, vector<16x32xf32> -> vector<16x32xf32>
    %28 = arith.addf %27, %0 : vector<16x32xf32>
    %cst_16 = arith.constant dense<0xFF800000> : vector<16xf32>
    %29 = vector.multi_reduction <maximumf>, %28, %cst_16 [1] : vector<16x32xf32> to vector<16xf32>
    %30 = vector.shape_cast %29 : vector<16xf32> to vector<16x1xf32>
    %31 = vector.broadcast %30 : vector<16x1xf32> to vector<16x32xf32>
    %32 = arith.subf %28, %31 : vector<16x32xf32>
    %33 = math.exp %32 : vector<16x32xf32>
    %cst_17 = arith.constant dense<0.000000e+00> : vector<16x32xf32>
    %34 = tpu.matmul %33, %1, %cst_17 {dimension_numbers = #tpu.dot_dimension_numbers<[1], [0], [0], [1], [0, 0, 1, 1], [], []>} : vector<16x32xf32>, vector<32x32xf32>, vector<16x32xf32> -> vector<16x32xf32>
    %35 = tpu.reciprocal %34 {approx = true} : vector<16x32xf32> -> vector<16x32xf32>
    %36 = arith.mulf %33, %35 : vector<16x32xf32>
    %cst_18 = arith.constant dense<0.000000e+00> : vector<16x32xf32>
    %37 = tpu.matmul %36, %26, %cst_18 {dimension_numbers = #tpu.dot_dimension_numbers<[1], [0], [0], [1], [0, 0, 1, 1], [], []>} : vector<16x32xf32>, vector<32x32xf32>, vector<16x32xf32> -> vector<16x32xf32>
    %c360 = arith.constant 360 : index
    %c0_19 = arith.constant 0 : index
    %38 = vector.load %arg1[%c360, %c0_19] : memref<872x128xf32, #tpu.memory_space<vmem>>, vector<32x32xf32>
    %cst_20 = arith.constant dense<0.000000e+00> : vector<16x32xf32>
    %39 = tpu.matmul %37, %38, %cst_20 {dimension_numbers = #tpu.dot_dimension_numbers<[1], [0], [0], [1], [0, 0, 1, 1], [], []>} : vector<16x32xf32>, vector<32x32xf32>, vector<16x32xf32> -> vector<16x32xf32>
    %c555 = arith.constant 555 : index
    %c0_21 = arith.constant 0 : index
    %40 = vector.load %arg1[%c555, %c0_21] : memref<872x128xf32, #tpu.memory_space<vmem>>, vector<1x32xf32>
    %41 = vector.broadcast %40 : vector<1x32xf32> to vector<16x32xf32>
    %42 = arith.addf %39, %41 : vector<16x32xf32>
    %43 = arith.addf %7, %42 : vector<16x32xf32>
    %c558 = arith.constant 558 : index
    %c0_22 = arith.constant 0 : index
    %44 = vector.load %arg1[%c558, %c0_22] : memref<872x128xf32, #tpu.memory_space<vmem>>, vector<1x32xf32>
    %c559 = arith.constant 559 : index
    %c0_23 = arith.constant 0 : index
    %45 = vector.load %arg1[%c559, %c0_23] : memref<872x128xf32, #tpu.memory_space<vmem>>, vector<1x32xf32>
    %cst_24 = arith.constant dense<0.000000e+00> : vector<16xf32>
    %46 = vector.multi_reduction <add>, %43, %cst_24 [1] : vector<16x32xf32> to vector<16xf32>
    %47 = vector.shape_cast %46 : vector<16xf32> to vector<16x1xf32>
    %cst_25 = arith.constant 3.200000e+01 : f32
    %48 = vector.broadcast %cst_25 : f32 to vector<16x1xf32>
    %49 = arith.divf %47, %48 : vector<16x1xf32>
    %50 = vector.broadcast %49 : vector<16x1xf32> to vector<16x32xf32>
    %51 = arith.subf %43, %50 : vector<16x32xf32>
    %52 = arith.mulf %51, %51 : vector<16x32xf32>
    %cst_26 = arith.constant dense<0.000000e+00> : vector<16xf32>
    %53 = vector.multi_reduction <add>, %52, %cst_26 [1] : vector<16x32xf32> to vector<16xf32>
    %54 = vector.shape_cast %53 : vector<16xf32> to vector<16x1xf32>
    %cst_27 = arith.constant 3.200000e+01 : f32
    %55 = vector.broadcast %cst_27 : f32 to vector<16x1xf32>
    %56 = arith.divf %54, %55 : vector<16x1xf32>
    %57 = vector.broadcast %49 : vector<16x1xf32> to vector<16x32xf32>
    %58 = arith.subf %43, %57 : vector<16x32xf32>
    %cst_28 = arith.constant 9.99999974E-6 : f32
    %59 = vector.broadcast %cst_28 : f32 to vector<16x1xf32>
    %60 = arith.addf %56, %59 : vector<16x1xf32>
    %61 = math.rsqrt %60 : vector<16x1xf32>
    %62 = vector.broadcast %61 : vector<16x1xf32> to vector<16x32xf32>
    %63 = arith.mulf %58, %62 : vector<16x32xf32>
    %64 = vector.broadcast %44 : vector<1x32xf32> to vector<16x32xf32>
    %65 = arith.mulf %63, %64 : vector<16x32xf32>
    %66 = vector.broadcast %45 : vector<1x32xf32> to vector<16x32xf32>
    %67 = arith.addf %65, %66 : vector<16x32xf32>
    %c392 = arith.constant 392 : index
    %c0_29 = arith.constant 0 : index
    %68 = vector.load %arg1[%c392, %c0_29] : memref<872x128xf32, #tpu.memory_space<vmem>>, vector<32x128xf32>
    %cst_30 = arith.constant dense<0.000000e+00> : vector<16x128xf32>
    %69 = tpu.matmul %67, %68, %cst_30 {dimension_numbers = #tpu.dot_dimension_numbers<[1], [0], [0], [1], [0, 0, 1, 1], [], []>} : vector<16x32xf32>, vector<32x128xf32>, vector<16x128xf32> -> vector<16x128xf32>
    %c556 = arith.constant 556 : index
    %c0_31 = arith.constant 0 : index
    %70 = vector.load %arg1[%c556, %c0_31] : memref<872x128xf32, #tpu.memory_space<vmem>>, vector<1x128xf32>
    %71 = vector.broadcast %70 : vector<1x128xf32> to vector<16x128xf32>
    %72 = arith.addf %69, %71 : vector<16x128xf32>
    %cst_32 = arith.constant 0.000000e+00 : f32
    %73 = vector.broadcast %cst_32 : f32 to vector<16x128xf32>
    %74 = arith.maximumf %72, %73 : vector<16x128xf32>
    %c424 = arith.constant 424 : index
    %c0_33 = arith.constant 0 : index
    %75 = vector.load %arg1[%c424, %c0_33] : memref<872x128xf32, #tpu.memory_space<vmem>>, vector<128x32xf32>
    %cst_34 = arith.constant dense<0.000000e+00> : vector<16x32xf32>
    %76 = tpu.matmul %74, %75, %cst_34 {dimension_numbers = #tpu.dot_dimension_numbers<[1], [0], [0], [1], [0, 0, 1, 1], [], []>} : vector<16x128xf32>, vector<128x32xf32>, vector<16x32xf32> -> vector<16x32xf32>
    %c557 = arith.constant 557 : index
    %c0_35 = arith.constant 0 : index
    %77 = vector.load %arg1[%c557, %c0_35] : memref<872x128xf32, #tpu.memory_space<vmem>>, vector<1x32xf32>
    %78 = vector.broadcast %77 : vector<1x32xf32> to vector<16x32xf32>
    %79 = arith.addf %76, %78 : vector<16x32xf32>
    %80 = arith.addf %67, %79 : vector<16x32xf32>
    %c560 = arith.constant 560 : index
    %c0_36 = arith.constant 0 : index
    %81 = vector.load %arg1[%c560, %c0_36] : memref<872x128xf32, #tpu.memory_space<vmem>>, vector<1x32xf32>
    %c561 = arith.constant 561 : index
    %c0_37 = arith.constant 0 : index
    %82 = vector.load %arg1[%c561, %c0_37] : memref<872x128xf32, #tpu.memory_space<vmem>>, vector<1x32xf32>
    %cst_38 = arith.constant dense<0.000000e+00> : vector<16xf32>
    %83 = vector.multi_reduction <add>, %80, %cst_38 [1] : vector<16x32xf32> to vector<16xf32>
    %84 = vector.shape_cast %83 : vector<16xf32> to vector<16x1xf32>
    %cst_39 = arith.constant 3.200000e+01 : f32
    %85 = vector.broadcast %cst_39 : f32 to vector<16x1xf32>
    %86 = arith.divf %84, %85 : vector<16x1xf32>
    %87 = vector.broadcast %86 : vector<16x1xf32> to vector<16x32xf32>
    %88 = arith.subf %80, %87 : vector<16x32xf32>
    %89 = arith.mulf %88, %88 : vector<16x32xf32>
    %cst_40 = arith.constant dense<0.000000e+00> : vector<16xf32>
    %90 = vector.multi_reduction <add>, %89, %cst_40 [1] : vector<16x32xf32> to vector<16xf32>
    %91 = vector.shape_cast %90 : vector<16xf32> to vector<16x1xf32>
    %cst_41 = arith.constant 3.200000e+01 : f32
    %92 = vector.broadcast %cst_41 : f32 to vector<16x1xf32>
    %93 = arith.divf %91, %92 : vector<16x1xf32>
    %94 = vector.broadcast %86 : vector<16x1xf32> to vector<16x32xf32>
    %95 = arith.subf %80, %94 : vector<16x32xf32>
    %cst_42 = arith.constant 9.99999974E-6 : f32
    %96 = vector.broadcast %cst_42 : f32 to vector<16x1xf32>
    %97 = arith.addf %93, %96 : vector<16x1xf32>
    %98 = math.rsqrt %97 : vector<16x1xf32>
    %99 = vector.broadcast %98 : vector<16x1xf32> to vector<16x32xf32>
    %100 = arith.mulf %95, %99 : vector<16x32xf32>
    %101 = vector.broadcast %81 : vector<1x32xf32> to vector<16x32xf32>
    %102 = arith.mulf %100, %101 : vector<16x32xf32>
    %103 = vector.broadcast %82 : vector<1x32xf32> to vector<16x32xf32>
    %104 = arith.addf %102, %103 : vector<16x32xf32>
    %c568 = arith.constant 568 : index
    %c0_43 = arith.constant 0 : index
    %105 = vector.load %arg1[%c568, %c0_43] : memref<872x128xf32, #tpu.memory_space<vmem>>, vector<32x32xf32>
    %cst_44 = arith.constant dense<0.000000e+00> : vector<16x32xf32>
    %106 = tpu.matmul %104, %105, %cst_44 {dimension_numbers = #tpu.dot_dimension_numbers<[1], [0], [0], [1], [0, 0, 1, 1], [], []>} : vector<16x32xf32>, vector<32x32xf32>, vector<16x32xf32> -> vector<16x32xf32>
    %c856 = arith.constant 856 : index
    %c0_45 = arith.constant 0 : index
    %107 = vector.load %arg1[%c856, %c0_45] : memref<872x128xf32, #tpu.memory_space<vmem>>, vector<1x32xf32>
    %108 = vector.broadcast %107 : vector<1x32xf32> to vector<16x32xf32>
    %109 = arith.addf %106, %108 : vector<16x32xf32>
    %c600 = arith.constant 600 : index
    %c0_46 = arith.constant 0 : index
    %110 = vector.load %arg1[%c600, %c0_46] : memref<872x128xf32, #tpu.memory_space<vmem>>, vector<32x32xf32>
    %cst_47 = arith.constant dense<0.000000e+00> : vector<16x32xf32>
    %111 = tpu.matmul %104, %110, %cst_47 {dimension_numbers = #tpu.dot_dimension_numbers<[1], [0], [0], [1], [0, 0, 1, 1], [], []>} : vector<16x32xf32>, vector<32x32xf32>, vector<16x32xf32> -> vector<16x32xf32>
    %c857 = arith.constant 857 : index
    %c0_48 = arith.constant 0 : index
    %112 = vector.load %arg1[%c857, %c0_48] : memref<872x128xf32, #tpu.memory_space<vmem>>, vector<1x32xf32>
    %113 = vector.broadcast %112 : vector<1x32xf32> to vector<16x32xf32>
    %114 = arith.addf %111, %113 : vector<16x32xf32>
    %c632 = arith.constant 632 : index
    %c0_49 = arith.constant 0 : index
    %115 = vector.load %arg1[%c632, %c0_49] : memref<872x128xf32, #tpu.memory_space<vmem>>, vector<32x32xf32>
    %cst_50 = arith.constant dense<0.000000e+00> : vector<16x32xf32>
    %116 = tpu.matmul %104, %115, %cst_50 {dimension_numbers = #tpu.dot_dimension_numbers<[1], [0], [0], [1], [0, 0, 1, 1], [], []>} : vector<16x32xf32>, vector<32x32xf32>, vector<16x32xf32> -> vector<16x32xf32>
    %c858 = arith.constant 858 : index
    %c0_51 = arith.constant 0 : index
    %117 = vector.load %arg1[%c858, %c0_51] : memref<872x128xf32, #tpu.memory_space<vmem>>, vector<1x32xf32>
    %118 = vector.broadcast %117 : vector<1x32xf32> to vector<16x32xf32>
    %119 = arith.addf %116, %118 : vector<16x32xf32>
    %120 = tpu.concatenate %114, %114 in 0 : vector<16x32xf32>, vector<16x32xf32> -> vector<32x32xf32>
    %121 = arith.mulf %120, %1 : vector<32x32xf32>
    %122 = tpu.concatenate %119, %119 in 0 : vector<16x32xf32>, vector<16x32xf32> -> vector<32x32xf32>
    %123 = arith.mulf %122, %1 : vector<32x32xf32>
    %cst_52 = arith.constant dense<0.000000e+00> : vector<16x32xf32>
    %124 = tpu.matmul %109, %121, %cst_52 {dimension_numbers = #tpu.dot_dimension_numbers<[1], [1], [0], [0], [0, 0, 1, 0], [], []>} : vector<16x32xf32>, vector<32x32xf32>, vector<16x32xf32> -> vector<16x32xf32>
    %125 = arith.addf %124, %0 : vector<16x32xf32>
    %cst_53 = arith.constant dense<0xFF800000> : vector<16xf32>
    %126 = vector.multi_reduction <maximumf>, %125, %cst_53 [1] : vector<16x32xf32> to vector<16xf32>
    %127 = vector.shape_cast %126 : vector<16xf32> to vector<16x1xf32>
    %128 = vector.broadcast %127 : vector<16x1xf32> to vector<16x32xf32>
    %129 = arith.subf %125, %128 : vector<16x32xf32>
    %130 = math.exp %129 : vector<16x32xf32>
    %cst_54 = arith.constant dense<0.000000e+00> : vector<16x32xf32>
    %131 = tpu.matmul %130, %1, %cst_54 {dimension_numbers = #tpu.dot_dimension_numbers<[1], [0], [0], [1], [0, 0, 1, 1], [], []>} : vector<16x32xf32>, vector<32x32xf32>, vector<16x32xf32> -> vector<16x32xf32>
    %132 = tpu.reciprocal %131 {approx = true} : vector<16x32xf32> -> vector<16x32xf32>
    %133 = arith.mulf %130, %132 : vector<16x32xf32>
    %cst_55 = arith.constant dense<0.000000e+00> : vector<16x32xf32>
    %134 = tpu.matmul %133, %123, %cst_55 {dimension_numbers = #tpu.dot_dimension_numbers<[1], [0], [0], [1], [0, 0, 1, 1], [], []>} : vector<16x32xf32>, vector<32x32xf32>, vector<16x32xf32> -> vector<16x32xf32>
    %c664 = arith.constant 664 : index
    %c0_56 = arith.constant 0 : index
    %135 = vector.load %arg1[%c664, %c0_56] : memref<872x128xf32, #tpu.memory_space<vmem>>, vector<32x32xf32>
    %cst_57 = arith.constant dense<0.000000e+00> : vector<16x32xf32>
    %136 = tpu.matmul %134, %135, %cst_57 {dimension_numbers = #tpu.dot_dimension_numbers<[1], [0], [0], [1], [0, 0, 1, 1], [], []>} : vector<16x32xf32>, vector<32x32xf32>, vector<16x32xf32> -> vector<16x32xf32>
    %c859 = arith.constant 859 : index
    %c0_58 = arith.constant 0 : index
    %137 = vector.load %arg1[%c859, %c0_58] : memref<872x128xf32, #tpu.memory_space<vmem>>, vector<1x32xf32>
    %138 = vector.broadcast %137 : vector<1x32xf32> to vector<16x32xf32>
    %139 = arith.addf %136, %138 : vector<16x32xf32>
    %140 = arith.addf %104, %139 : vector<16x32xf32>
    %c862 = arith.constant 862 : index
    %c0_59 = arith.constant 0 : index
    %141 = vector.load %arg1[%c862, %c0_59] : memref<872x128xf32, #tpu.memory_space<vmem>>, vector<1x32xf32>
    %c863 = arith.constant 863 : index
    %c0_60 = arith.constant 0 : index
    %142 = vector.load %arg1[%c863, %c0_60] : memref<872x128xf32, #tpu.memory_space<vmem>>, vector<1x32xf32>
    %cst_61 = arith.constant dense<0.000000e+00> : vector<16xf32>
    %143 = vector.multi_reduction <add>, %140, %cst_61 [1] : vector<16x32xf32> to vector<16xf32>
    %144 = vector.shape_cast %143 : vector<16xf32> to vector<16x1xf32>
    %cst_62 = arith.constant 3.200000e+01 : f32
    %145 = vector.broadcast %cst_62 : f32 to vector<16x1xf32>
    %146 = arith.divf %144, %145 : vector<16x1xf32>
    %147 = vector.broadcast %146 : vector<16x1xf32> to vector<16x32xf32>
    %148 = arith.subf %140, %147 : vector<16x32xf32>
    %149 = arith.mulf %148, %148 : vector<16x32xf32>
    %cst_63 = arith.constant dense<0.000000e+00> : vector<16xf32>
    %150 = vector.multi_reduction <add>, %149, %cst_63 [1] : vector<16x32xf32> to vector<16xf32>
    %151 = vector.shape_cast %150 : vector<16xf32> to vector<16x1xf32>
    %cst_64 = arith.constant 3.200000e+01 : f32
    %152 = vector.broadcast %cst_64 : f32 to vector<16x1xf32>
    %153 = arith.divf %151, %152 : vector<16x1xf32>
    %154 = vector.broadcast %146 : vector<16x1xf32> to vector<16x32xf32>
    %155 = arith.subf %140, %154 : vector<16x32xf32>
    %cst_65 = arith.constant 9.99999974E-6 : f32
    %156 = vector.broadcast %cst_65 : f32 to vector<16x1xf32>
    %157 = arith.addf %153, %156 : vector<16x1xf32>
    %158 = math.rsqrt %157 : vector<16x1xf32>
    %159 = vector.broadcast %158 : vector<16x1xf32> to vector<16x32xf32>
    %160 = arith.mulf %155, %159 : vector<16x32xf32>
    %161 = vector.broadcast %141 : vector<1x32xf32> to vector<16x32xf32>
    %162 = arith.mulf %160, %161 : vector<16x32xf32>
    %163 = vector.broadcast %142 : vector<1x32xf32> to vector<16x32xf32>
    %164 = arith.addf %162, %163 : vector<16x32xf32>
    %c696 = arith.constant 696 : index
    %c0_66 = arith.constant 0 : index
    %165 = vector.load %arg1[%c696, %c0_66] : memref<872x128xf32, #tpu.memory_space<vmem>>, vector<32x128xf32>
    %cst_67 = arith.constant dense<0.000000e+00> : vector<16x128xf32>
    %166 = tpu.matmul %164, %165, %cst_67 {dimension_numbers = #tpu.dot_dimension_numbers<[1], [0], [0], [1], [0, 0, 1, 1], [], []>} : vector<16x32xf32>, vector<32x128xf32>, vector<16x128xf32> -> vector<16x128xf32>
    %c860 = arith.constant 860 : index
    %c0_68 = arith.constant 0 : index
    %167 = vector.load %arg1[%c860, %c0_68] : memref<872x128xf32, #tpu.memory_space<vmem>>, vector<1x128xf32>
    %168 = vector.broadcast %167 : vector<1x128xf32> to vector<16x128xf32>
    %169 = arith.addf %166, %168 : vector<16x128xf32>
    %cst_69 = arith.constant 0.000000e+00 : f32
    %170 = vector.broadcast %cst_69 : f32 to vector<16x128xf32>
    %171 = arith.maximumf %169, %170 : vector<16x128xf32>
    %c728 = arith.constant 728 : index
    %c0_70 = arith.constant 0 : index
    %172 = vector.load %arg1[%c728, %c0_70] : memref<872x128xf32, #tpu.memory_space<vmem>>, vector<128x32xf32>
    %cst_71 = arith.constant dense<0.000000e+00> : vector<16x32xf32>
    %173 = tpu.matmul %171, %172, %cst_71 {dimension_numbers = #tpu.dot_dimension_numbers<[1], [0], [0], [1], [0, 0, 1, 1], [], []>} : vector<16x128xf32>, vector<128x32xf32>, vector<16x32xf32> -> vector<16x32xf32>
    %c861 = arith.constant 861 : index
    %c0_72 = arith.constant 0 : index
    %174 = vector.load %arg1[%c861, %c0_72] : memref<872x128xf32, #tpu.memory_space<vmem>>, vector<1x32xf32>
    %175 = vector.broadcast %174 : vector<1x32xf32> to vector<16x32xf32>
    %176 = arith.addf %173, %175 : vector<16x32xf32>
    %177 = arith.addf %164, %176 : vector<16x32xf32>
    %c864 = arith.constant 864 : index
    %c0_73 = arith.constant 0 : index
    %178 = vector.load %arg1[%c864, %c0_73] : memref<872x128xf32, #tpu.memory_space<vmem>>, vector<1x32xf32>
    %c865 = arith.constant 865 : index
    %c0_74 = arith.constant 0 : index
    %179 = vector.load %arg1[%c865, %c0_74] : memref<872x128xf32, #tpu.memory_space<vmem>>, vector<1x32xf32>
    %cst_75 = arith.constant dense<0.000000e+00> : vector<16xf32>
    %180 = vector.multi_reduction <add>, %177, %cst_75 [1] : vector<16x32xf32> to vector<16xf32>
    %181 = vector.shape_cast %180 : vector<16xf32> to vector<16x1xf32>
    %cst_76 = arith.constant 3.200000e+01 : f32
    %182 = vector.broadcast %cst_76 : f32 to vector<16x1xf32>
    %183 = arith.divf %181, %182 : vector<16x1xf32>
    %184 = vector.broadcast %183 : vector<16x1xf32> to vector<16x32xf32>
    %185 = arith.subf %177, %184 : vector<16x32xf32>
    %186 = arith.mulf %185, %185 : vector<16x32xf32>
    %cst_77 = arith.constant dense<0.000000e+00> : vector<16xf32>
    %187 = vector.multi_reduction <add>, %186, %cst_77 [1] : vector<16x32xf32> to vector<16xf32>
    %188 = vector.shape_cast %187 : vector<16xf32> to vector<16x1xf32>
    %cst_78 = arith.constant 3.200000e+01 : f32
    %189 = vector.broadcast %cst_78 : f32 to vector<16x1xf32>
    %190 = arith.divf %188, %189 : vector<16x1xf32>
    %191 = vector.broadcast %183 : vector<16x1xf32> to vector<16x32xf32>
    %192 = arith.subf %177, %191 : vector<16x32xf32>
    %cst_79 = arith.constant 9.99999974E-6 : f32
    %193 = vector.broadcast %cst_79 : f32 to vector<16x1xf32>
    %194 = arith.addf %190, %193 : vector<16x1xf32>
    %195 = math.rsqrt %194 : vector<16x1xf32>
    %196 = vector.broadcast %195 : vector<16x1xf32> to vector<16x32xf32>
    %197 = arith.mulf %192, %196 : vector<16x32xf32>
    %198 = vector.broadcast %178 : vector<1x32xf32> to vector<16x32xf32>
    %199 = arith.mulf %197, %198 : vector<16x32xf32>
    %200 = vector.broadcast %179 : vector<1x32xf32> to vector<16x32xf32>
    %201 = arith.addf %199, %200 : vector<16x32xf32>
    %c240 = arith.constant 240 : index
    %c0_80 = arith.constant 0 : index
    %202 = vector.load %arg1[%c240, %c0_80] : memref<872x128xf32, #tpu.memory_space<vmem>>, vector<8x16xf32>
    %cst_81 = arith.constant dense<0.000000e+00> : vector<8x32xf32>
    %203 = tpu.matmul %202, %201, %cst_81 {dimension_numbers = #tpu.dot_dimension_numbers<[1], [0], [0], [1], [0, 0, 1, 1], [], []>} : vector<8x16xf32>, vector<16x32xf32>, vector<8x32xf32> -> vector<8x32xf32>
    %c128 = arith.constant 128 : index
    %c0_82 = arith.constant 0 : index
    %204 = vector.load %arg1[%c128, %c0_82] : memref<872x128xf32, #tpu.memory_space<vmem>>, vector<32x32xf32>
    %cst_83 = arith.constant dense<0.000000e+00> : vector<8x32xf32>
    %205 = tpu.matmul %203, %204, %cst_83 {dimension_numbers = #tpu.dot_dimension_numbers<[1], [0], [0], [1], [0, 0, 1, 1], [], []>} : vector<8x32xf32>, vector<32x32xf32>, vector<8x32xf32> -> vector<8x32xf32>
    %c249 = arith.constant 249 : index
    %c0_84 = arith.constant 0 : index
    %206 = vector.load %arg1[%c249, %c0_84] : memref<872x128xf32, #tpu.memory_space<vmem>>, vector<1x32xf32>
    %207 = vector.broadcast %206 : vector<1x32xf32> to vector<8x32xf32>
    %208 = arith.addf %205, %207 : vector<8x32xf32>
    %c250 = arith.constant 250 : index
    %c0_85 = arith.constant 0 : index
    %209 = vector.load %arg1[%c250, %c0_85] : memref<872x128xf32, #tpu.memory_space<vmem>>, vector<1x32xf32>
    %c251 = arith.constant 251 : index
    %c0_86 = arith.constant 0 : index
    %210 = vector.load %arg1[%c251, %c0_86] : memref<872x128xf32, #tpu.memory_space<vmem>>, vector<1x32xf32>
    %cst_87 = arith.constant dense<0.000000e+00> : vector<8xf32>
    %211 = vector.multi_reduction <add>, %208, %cst_87 [1] : vector<8x32xf32> to vector<8xf32>
    %212 = vector.shape_cast %211 : vector<8xf32> to vector<8x1xf32>
    %cst_88 = arith.constant 3.200000e+01 : f32
    %213 = vector.broadcast %cst_88 : f32 to vector<8x1xf32>
    %214 = arith.divf %212, %213 : vector<8x1xf32>
    %215 = vector.broadcast %214 : vector<8x1xf32> to vector<8x32xf32>
    %216 = arith.subf %208, %215 : vector<8x32xf32>
    %217 = arith.mulf %216, %216 : vector<8x32xf32>
    %cst_89 = arith.constant dense<0.000000e+00> : vector<8xf32>
    %218 = vector.multi_reduction <add>, %217, %cst_89 [1] : vector<8x32xf32> to vector<8xf32>
    %219 = vector.shape_cast %218 : vector<8xf32> to vector<8x1xf32>
    %cst_90 = arith.constant 3.200000e+01 : f32
    %220 = vector.broadcast %cst_90 : f32 to vector<8x1xf32>
    %221 = arith.divf %219, %220 : vector<8x1xf32>
    %222 = vector.broadcast %214 : vector<8x1xf32> to vector<8x32xf32>
    %223 = arith.subf %208, %222 : vector<8x32xf32>
    %cst_91 = arith.constant 9.99999974E-6 : f32
    %224 = vector.broadcast %cst_91 : f32 to vector<8x1xf32>
    %225 = arith.addf %221, %224 : vector<8x1xf32>
    %226 = math.rsqrt %225 : vector<8x1xf32>
    %227 = vector.broadcast %226 : vector<8x1xf32> to vector<8x32xf32>
    %228 = arith.mulf %223, %227 : vector<8x32xf32>
    %229 = vector.broadcast %209 : vector<1x32xf32> to vector<8x32xf32>
    %230 = arith.mulf %228, %229 : vector<8x32xf32>
    %231 = vector.broadcast %210 : vector<1x32xf32> to vector<8x32xf32>
    %232 = arith.addf %230, %231 : vector<8x32xf32>
    %c160 = arith.constant 160 : index
    %c0_92 = arith.constant 0 : index
    %233 = vector.load %arg1[%c160, %c0_92] : memref<872x128xf32, #tpu.memory_space<vmem>>, vector<32x128xf32>
    %cst_93 = arith.constant dense<0.000000e+00> : vector<8x128xf32>
    %234 = tpu.matmul %232, %233, %cst_93 {dimension_numbers = #tpu.dot_dimension_numbers<[1], [0], [0], [1], [0, 0, 1, 1], [], []>} : vector<8x32xf32>, vector<32x128xf32>, vector<8x128xf32> -> vector<8x128xf32>
    %235 = arith.mulf %232, %232 : vector<8x32xf32>
    %cst_94 = arith.constant dense<0.000000e+00> : vector<8xf32>
    %236 = vector.multi_reduction <add>, %235, %cst_94 [1] : vector<8x32xf32> to vector<8xf32>
    %237 = vector.shape_cast %236 : vector<8xf32> to vector<8x1xf32>
    %c252 = arith.constant 252 : index
    %c0_95 = arith.constant 0 : index
    %238 = vector.load %arg1[%c252, %c0_95] : memref<872x128xf32, #tpu.memory_space<vmem>>, vector<1x128xf32>
    %239 = vector.broadcast %237 : vector<8x1xf32> to vector<8x128xf32>
    %240 = vector.broadcast %238 : vector<1x128xf32> to vector<8x128xf32>
    %241 = arith.addf %239, %240 : vector<8x128xf32>
    %cst_96 = arith.constant 2.000000e+00 : f32
    %242 = vector.broadcast %cst_96 : f32 to vector<8x128xf32>
    %243 = arith.mulf %242, %234 : vector<8x128xf32>
    %244 = arith.subf %241, %243 : vector<8x128xf32>
    %cst_97 = arith.constant 0.000000e+00 : f32
    %245 = vector.broadcast %cst_97 : f32 to vector<8x128xf32>
    %246 = arith.maximumf %244, %245 : vector<8x128xf32>
    %247 = math.sqrt %246 : vector<8x128xf32>
    %c254 = arith.constant 254 : index
    %c0_98 = arith.constant 0 : index
    %248 = vector.load %arg1[%c254, %c0_98] : memref<872x128xf32, #tpu.memory_space<vmem>>, vector<1x128xf32>
    %249 = vector.broadcast %248 : vector<1x128xf32> to vector<8x128xf32>
    %250 = arith.mulf %247, %249 : vector<8x128xf32>
    %cst_99 = arith.constant 2.23606801 : f32
    %251 = vector.broadcast %cst_99 : f32 to vector<8x128xf32>
    %252 = arith.mulf %251, %250 : vector<8x128xf32>
    %cst_100 = arith.constant 1.000000e+00 : f32
    %253 = vector.broadcast %cst_100 : f32 to vector<8x128xf32>
    %254 = arith.addf %253, %252 : vector<8x128xf32>
    %255 = arith.mulf %250, %250 : vector<8x128xf32>
    %cst_101 = arith.constant 1.66666663 : f32
    %256 = vector.broadcast %cst_101 : f32 to vector<8x128xf32>
    %257 = arith.mulf %256, %255 : vector<8x128xf32>
    %258 = arith.addf %254, %257 : vector<8x128xf32>
    %cst_102 = arith.constant -2.23606801 : f32
    %259 = vector.broadcast %cst_102 : f32 to vector<8x128xf32>
    %260 = arith.mulf %259, %250 : vector<8x128xf32>
    %261 = math.exp %260 : vector<8x128xf32>
    %262 = arith.mulf %258, %261 : vector<8x128xf32>
    %cst_103 = arith.constant 0.000000e+00 : f32
    %263 = vector.broadcast %cst_103 : f32 to vector<8x128xf32>
    %264 = arith.subf %263, %246 : vector<8x128xf32>
    %c255 = arith.constant 255 : index
    %c0_104 = arith.constant 0 : index
    %265 = vector.load %arg1[%c255, %c0_104] : memref<872x128xf32, #tpu.memory_space<vmem>>, vector<1x128xf32>
    %266 = vector.broadcast %265 : vector<1x128xf32> to vector<8x128xf32>
    %267 = arith.mulf %264, %266 : vector<8x128xf32>
    %268 = math.exp %267 : vector<8x128xf32>
    %269 = arith.addf %262, %268 : vector<8x128xf32>
    %c253 = arith.constant 253 : index
    %c0_105 = arith.constant 0 : index
    %270 = vector.load %arg1[%c253, %c0_105] : memref<872x128xf32, #tpu.memory_space<vmem>>, vector<1x128xf32>
    %271 = vector.broadcast %270 : vector<1x128xf32> to vector<8x128xf32>
    %272 = arith.mulf %269, %271 : vector<8x128xf32>
    %cst_106 = arith.constant dense<0.000000e+00> : vector<8xf32>
    %273 = vector.multi_reduction <add>, %272, %cst_106 [1] : vector<8x128xf32> to vector<8xf32>
    %274 = vector.shape_cast %273 : vector<8xf32> to vector<8x1xf32>
    %275 = vector.shape_cast %274 : vector<8x1xf32> to vector<8x1xf32>
    %276 = vector.broadcast %275 : vector<8x1xf32> to vector<8x128xf32>
    %c256 = arith.constant 256 : index
    %c0_107 = arith.constant 0 : index
    %277 = vector.load %arg1[%c256, %c0_107] : memref<872x128xf32, #tpu.memory_space<vmem>>, vector<1x128xf32>
    %278 = vector.broadcast %277 : vector<1x128xf32> to vector<8x128xf32>
    %279 = arith.addf %276, %278 : vector<8x128xf32>
    %c0_108 = arith.constant 0 : index
    %c0_109 = arith.constant 0 : index
    %280 = vector.load %arg2[%c0_108, %c0_109] : memref<8x128xf32, #tpu.memory_space<vmem>>, vector<8x128xf32>
    tpu.vector_store %arg2[%c0_108, %c0_109], %279 {strides = array<i32>} : memref<8x128xf32, #tpu.memory_space<vmem>>, vector<8x128xf32>,
    return
  }
}

</mosaic_0001>

<llo_original>
// kernel: residual_model_svgp_forward.1
$region0: #{residual_model_svgp_forward.1}
  #allocation0 [shape = 'u32[]', space=smem, size = 0x4, offset = 0x4, fixed_abs, tag = 'smem constant byte address 0x4 - core index']
  #allocation1 [shape = 'u32[144,128]{1,0:T(1,128)}', space=vmem, size = 0x12000, scoped, tag = 'internal scratch']
  %s0 = inlined_call_operand.vmem [shape: f32[16,128], index: 0, kind: input, shape index: {}]
  %s1 = inlined_call_operand.hbm [shape: f32[872,128], index: 1, kind: input, shape index: {}]
  %s2 = inlined_call_operand.vmem [shape: f32[8,128], index: 2, kind: output, shape index: {}]
  %s3 = sld [smem:[#allocation0]]
  $region22: #{residual_model_svgp_forward.1} parent=0
    _
  %s5 = ssub.s32 1, %s3
  %s6 = scalar_select 0, %s5, %s3
  $region1: #{residual_model_svgp_forward.1} parent=0
    #allocation2 [shape = 'u8[446464]{0}', space=vmem, size = 0x6d000, scoped, tag = 'input window, operand 1, single buffered']
    #allocation3 [shape = 's32[1]{0}', space=sflag, size = 0x4, scoped, tag = 'scoped memory for residual_model_svgp_forward.1']
    %7 = vsyncpa [#allocation3], 0
    // Predicated region
    $region2: #{residual_model_svgp_forward.1} parent=1 // pred_check
      _
    $region3: #{residual_model_svgp_forward.1} parent=1 // pred_check_branch
      %9 = sbr.rel (0) target = $region5
    $region4: #{residual_model_svgp_forward.1} parent=1 // pred_region
      _
    $region5: #{residual_model_svgp_forward.1} parent=1 // pred_fallthru
      _
    // Predicated region
    $region6: #{residual_model_svgp_forward.1} parent=1 // pred_check
      _
    $region7: #{residual_model_svgp_forward.1} parent=1 // pred_check_branch
      %11 = sbr.rel (0) target = $region9
    $region8: #{residual_model_svgp_forward.1} parent=1 // pred_region
      %s13 = ssub.s32 13952, 13952
      %14 = vsyncadd [#allocation3], %s13
      %s15 = sshll.u32 [#allocation2], 4
      %s16 = int_to_ptr.vmem [resolvable:$true] %s15
      %21 = dma.hbm_to_vmem [thread:$0]  %s1, 13952, %s16, [#allocation3], 128, 128, 8
    $region9: #{residual_model_svgp_forward.1} parent=1 // pred_fallthru
      _
    // Predicated region
    $region10: #{residual_model_svgp_forward.1} parent=1 // pred_check
      _
    $region11: #{residual_model_svgp_forward.1} parent=1 // pred_check_branch
      %23 = sbr.rel (0) target = $region13
    $region12: #{residual_model_svgp_forward.1} parent=1 // pred_region
      %24 = dma.done [#allocation3], 13952
    $region13: #{residual_model_svgp_forward.1} parent=1 // pred_fallthru
      _
    %v25 = vld [vmem:[#allocation2 + $0xc0] sm:$0xff]
    %v26 = vld [vmem:[#allocation2 + $0xc8] sm:$0xff]
    %v27 = vld [vmem:[#allocation2 + $0xd0] sm:$0xff]
    %v28 = vld [vmem:[#allocation2 + $0xd8] sm:$0xff]
    %v29 = vld [vmem:[#allocation2 + $0xe0] sm:$0xff]
    %v30 = vld [vmem:[#allocation2 + $0xe8] sm:$0xff]
    %v31 = vld [vmem:[%s0] sm:$0xff]
    %v32 = vld [vmem:[%s0 + $0x8] sm:$0xff]
    %v33 = vld [vmem:[#allocation2] sm:$0xff]
    %v34 = vld [vmem:[#allocation2 + $0x8] sm:$0xff]
    %v35 = vld [vmem:[#allocation2 + $0x10] sm:$0xff]
    %v36 = vld [vmem:[#allocation2 + $0x18] sm:$0xff]
    %v37 = vld [vmem:[#allocation2 + $0x20] sm:$0xff]
    %v38 = vld [vmem:[#allocation2 + $0x28] sm:$0xff]
    %v39 = vld [vmem:[#allocation2 + $0x30] sm:$0xff]
    %v40 = vld [vmem:[#allocation2 + $0x38] sm:$0xff]
    %v41 = vld [vmem:[#allocation2 + $0x40] sm:$0xff]
    %v42 = vld [vmem:[#allocation2 + $0x48] sm:$0xff]
    %v43 = vld [vmem:[#allocation2 + $0x50] sm:$0xff]
    %v44 = vld [vmem:[#allocation2 + $0x58] sm:$0xff]
    %v45 = vld [vmem:[#allocation2 + $0x60] sm:$0xff]
    %v46 = vld [vmem:[#allocation2 + $0x68] sm:$0xff]
    %v47 = vld [vmem:[#allocation2 + $0x70] sm:$0xff]
    %v48 = vld [vmem:[#allocation2 + $0x78] sm:$0xff]
    %v49 = vld [vmem:[#allocation2 + $0xf8] sm:$0x1]
    %v50 = vlaneseq
    %v51 = vshrl.u32 %v50, 7
    %v52 = vsub.s32 0, %v51
    %v53 = vrot.slane %v49, %v52
    %54 = vmatprep.subr.mxu0 0.0
    %55 = vmatpush1.msra.mxu0 %v33
    %56 = vmatprep.subr.mxu0 0.0
    %57 = vmatpush1.msra.mxu0 %v34
    %58 = vmatprep.subr.mxu0 0.0
    %59 = vmatpush1.msra.mxu0 %v35
    %60 = vmatprep.subr.mxu0 0.0
    %61 = vmatpush1.msra.mxu0 %v36
    %62 = vmatprep.subr.mxu0 0.0
    %63 = vmatpush1.msra.mxu0 %v37
    %64 = vmatprep.subr.mxu0 0.0
    %65 = vmatpush1.msra.mxu0 %v38
    %66 = vmatprep.subr.mxu0 0.0
    %67 = vmatpush1.msra.mxu0 %v39
    %68 = vmatprep.subr.mxu0 0.0
    %69 = vmatpush1.msra.mxu0 %v40
    %70 = vmatprep.subr.mxu0 0.0
    %71 = vmatpush1.msra.mxu0 %v41
    %72 = vmatprep.subr.mxu0 0.0
    %73 = vmatpush1.msra.mxu0 %v42
    %74 = vmatprep.subr.mxu0 0.0
    %75 = vmatpush1.msra.mxu0 %v43
    %76 = vmatprep.subr.mxu0 0.0
    %77 = vmatpush1.msra.mxu0 %v44
    %78 = vmatprep.subr.mxu0 0.0
    %79 = vmatpush1.msra.mxu0 %v45
    %80 = vmatprep.subr.mxu0 0.0
    %81 = vmatpush1.msra.mxu0 %v46
    %82 = vmatprep.subr.mxu0 0.0
    %83 = vmatpush1.msra.mxu0 %v47
    %84 = vmatprep.subr.mxu0 0.0
    %85 = vmatpush1.msra.mxu0 %v48
    %86 = vmatprep.subr.mxu0 0.0
    %87 = vmatpush1.msra.mxu0 0.0
    %88 = vmatprep.subr.mxu0 0.0
    %89 = vmatpush1.msra.mxu0 0.0
    %90 = vmatprep.subr.mxu0 0.0
    %91 = vmatpush1.msra.mxu0 0.0
    %92 = vmatprep.subr.mxu0 0.0
    %93 = vmatpush1.msra.mxu0 0.0
    %94 = vmatprep.subr.mxu0 0.0
    %95 = vmatpush1.msra.mxu0 0.0
    %96 = vmatprep.subr.mxu0 0.0
    %97 = vmatpush1.msra.mxu0 0.0
    %98 = vmatprep.subr.mxu0 0.0
    %99 = vmatpush1.msra.mxu0 0.0
    %100 = vmatprep.subr.mxu0 0.0
    %101 = vmatpush1.msra.mxu0 0.0
    %102 = vmatprep.subr.mxu0 0.0
    %103 = vmatpush1.msra.mxu0 0.0
    %104 = vmatprep.subr.mxu0 0.0
    %105 = vmatpush1.msra.mxu0 0.0
    %106 = vmatprep.subr.mxu0 0.0
    %107 = vmatpush1.msra.mxu0 0.0
    %108 = vmatprep.subr.mxu0 0.0
    %109 = vmatpush1.msra.mxu0 0.0
    %110 = vmatprep.subr.mxu0 0.0
    %111 = vmatpush1.msra.mxu0 0.0
    %112 = vmatprep.subr.mxu0 0.0
    %113 = vmatpush1.msra.mxu0 0.0
    %114 = vmatprep.subr.mxu0 0.0
    %115 = vmatpush1.msra.mxu0 0.0
    %116 = vmatprep.subr.mxu0 0.0
    %117 = vmatpush1.msra.mxu0 0.0
    %118 = vmatprep.mubr.f32.mxu0 0.0
    %119 = vmatmul.mubr.f32.gmra.mrb[0].mxu0 %v31
    %v120 = vpop.f32.mrb[0].mxu0
    %v121 = vadd.f32 %v53, %v120
    %v122 = vpop.f32.mrb[0].mxu0
    %123 = vmatprep.mubr.f32.mxu0 0.0
    %124 = vmatmul.mubr.f32.gmra.mrb[0].mxu0 %v32
    %v125 = vpop.f32.mrb[0].mxu0
    %v126 = vadd.f32 %v53, %v125
    %v127 = vpop.f32.mrb[0].mxu0
    %128 = vdwg.mxu0
    %v129 = vld [vmem:[#allocation2 + $0x108] sm:$0xff]
    %v130 = vld [vmem:[#allocation2 + $0x110] sm:$0xff]
    %v131 = vld [vmem:[#allocation2 + $0x118] sm:$0xff]
    %v132 = vld [vmem:[#allocation2 + $0x120] sm:$0xff]
    %v133 = vld [vmem:[#allocation2 + $0x228] sm:$0x1]
    %v134 = vlaneseq
    %v135 = vshrl.u32 %v134, 7
    %v136 = vsub.s32 0, %v135
    %v137 = vrot.slane %v133, %v136
    %vm138 = vcmask 261120
    %v140 = vsel %vm138, %v121, 0
    %v143 = vsel %vm138, %v126, 0
    %145 = vmatprep.subr.mxu0 0.0
    %146 = vmatpush1.msra.mxu0 %v129
    %147 = vmatprep.subr.mxu0 0.0
    %148 = vmatpush1.msra.mxu0 %v130
    %149 = vmatprep.subr.mxu0 0.0
    %150 = vmatpush1.msra.mxu0 %v131
    %151 = vmatprep.subr.mxu0 0.0
    %152 = vmatpush1.msra.mxu0 %v132
    %153 = vmatprep.subr.mxu0 0.0
    %154 = vmatpush1.msra.mxu0 0.0
    %155 = vmatprep.subr.mxu0 0.0
    %156 = vmatpush1.msra.mxu0 0.0
    %157 = vmatprep.subr.mxu0 0.0
    %158 = vmatpush1.msra.mxu0 0.0
    %159 = vmatprep.subr.mxu0 0.0
    %160 = vmatpush1.msra.mxu0 0.0
    %161 = vmatprep.subr.mxu0 0.0
    %162 = vmatpush1.msra.mxu0 0.0
    %163 = vmatprep.subr.mxu0 0.0
    %164 = vmatpush1.msra.mxu0 0.0
    %165 = vmatprep.subr.mxu0 0.0
    %166 = vmatpush1.msra.mxu0 0.0
    %167 = vmatprep.subr.mxu0 0.0
    %168 = vmatpush1.msra.mxu0 0.0
    %169 = vmatprep.subr.mxu0 0.0
    %170 = vmatpush1.msra.mxu0 0.0
    %171 = vmatprep.subr.mxu0 0.0
    %172 = vmatpush1.msra.mxu0 0.0
    %173 = vmatprep.subr.mxu0 0.0
    %174 = vmatpush1.msra.mxu0 0.0
    %175 = vmatprep.subr.mxu0 0.0
    %176 = vmatpush1.msra.mxu0 0.0
    %177 = vmatprep.subr.mxu0 0.0
    %178 = vmatpush1.msra.mxu0 0.0
    %179 = vmatprep.subr.mxu0 0.0
    %180 = vmatpush1.msra.mxu0 0.0
    %181 = vmatprep.subr.mxu0 0.0
    %182 = vmatpush1.msra.mxu0 0.0
    %183 = vmatprep.subr.mxu0 0.0
    %184 = vmatpush1.msra.mxu0 0.0
    %185 = vmatprep.subr.mxu0 0.0
    %186 = vmatpush1.msra.mxu0 0.0
    %187 = vmatprep.subr.mxu0 0.0
    %188 = vmatpush1.msra.mxu0 0.0
    %189 = vmatprep.subr.mxu0 0.0
    %190 = vmatpush1.msra.mxu0 0.0
    %191 = vmatprep.subr.mxu0 0.0
    %192 = vmatpush1.msra.mxu0 0.0
    %193 = vmatprep.subr.mxu0 0.0
    %194 = vmatpush1.msra.mxu0 0.0
    %195 = vmatprep.subr.mxu0 0.0
    %196 = vmatpush1.msra.mxu0 0.0
    %197 = vmatprep.subr.mxu0 0.0
    %198 = vmatpush1.msra.mxu0 0.0
    %199 = vmatprep.subr.mxu0 0.0
    %200 = vmatpush1.msra.mxu0 0.0
    %201 = vmatprep.subr.mxu0 0.0
    %202 = vmatpush1.msra.mxu0 0.0
    %203 = vmatprep.subr.mxu0 0.0
    %204 = vmatpush1.msra.mxu0 0.0
    %205 = vmatprep.subr.mxu0 0.0
    %206 = vmatpush1.msra.mxu0 0.0
    %207 = vmatprep.subr.mxu0 0.0
    %208 = vmatpush1.msra.mxu0 0.0
    %209 = vmatprep.mubr.f32.mxu0 0.0
    %210 = vmatmul.mubr.f32.gmra.mrb[0].mxu0 %v140
    %v211 = vpop.f32.mrb[0].mxu0
    %v212 = vadd.f32 %v137, %v211
    %v213 = vpop.f32.mrb[0].mxu0
    %214 = vmatprep.mubr.f32.mxu0 0.0
    %215 = vmatmul.mubr.f32.gmra.mrb[0].mxu0 %v143
    %v216 = vpop.f32.mrb[0].mxu0
    %v217 = vadd.f32 %v137, %v216
    %v218 = vpop.f32.mrb[0].mxu0
    %219 = vdwg.mxu0
    %v220 = vld [vmem:[#allocation2 + $0x128] sm:$0xff]
    %v221 = vld [vmem:[#allocation2 + $0x130] sm:$0xff]
    %v222 = vld [vmem:[#allocation2 + $0x138] sm:$0xff]
    %v223 = vld [vmem:[#allocation2 + $0x140] sm:$0xff]
    %v224 = vld [vmem:[#allocation2 + $0x229] sm:$0x1]
    %v225 = vlaneseq
    %v226 = vshrl.u32 %v225, 7
    %v227 = vsub.s32 0, %v226
    %v228 = vrot.slane %v224, %v227
    %229 = vmatprep.subr.mxu0 0.0
    %230 = vmatpush1.msra.mxu0 %v220
    %231 = vmatprep.subr.mxu0 0.0
    %232 = vmatpush1.msra.mxu0 %v221
    %233 = vmatprep.subr.mxu0 0.0
    %234 = vmatpush1.msra.mxu0 %v222
    %235 = vmatprep.subr.mxu0 0.0
    %236 = vmatpush1.msra.mxu0 %v223
    %237 = vmatprep.subr.mxu0 0.0
    %238 = vmatpush1.msra.mxu0 0.0
    %239 = vmatprep.subr.mxu0 0.0
    %240 = vmatpush1.msra.mxu0 0.0
    %241 = vmatprep.subr.mxu0 0.0
    %242 = vmatpush1.msra.mxu0 0.0
    %243 = vmatprep.subr.mxu0 0.0
    %244 = vmatpush1.msra.mxu0 0.0
    %245 = vmatprep.subr.mxu0 0.0
    %246 = vmatpush1.msra.mxu0 0.0
    %247 = vmatprep.subr.mxu0 0.0
    %248 = vmatpush1.msra.mxu0 0.0
    %249 = vmatprep.subr.mxu0 0.0
    %250 = vmatpush1.msra.mxu0 0.0
    %251 = vmatprep.subr.mxu0 0.0
    %252 = vmatpush1.msra.mxu0 0.0
    %253 = vmatprep.subr.mxu0 0.0
    %254 = vmatpush1.msra.mxu0 0.0
    %255 = vmatprep.subr.mxu0 0.0
    %256 = vmatpush1.msra.mxu0 0.0
    %257 = vmatprep.subr.mxu0 0.0
    %258 = vmatpush1.msra.mxu0 0.0
    %259 = vmatprep.subr.mxu0 0.0
    %260 = vmatpush1.msra.mxu0 0.0
    %261 = vmatprep.subr.mxu0 0.0
    %262 = vmatpush1.msra.mxu0 0.0
    %263 = vmatprep.subr.mxu0 0.0
    %264 = vmatpush1.msra.mxu0 0.0
    %265 = vmatprep.subr.mxu0 0.0
    %266 = vmatpush1.msra.mxu0 0.0
    %267 = vmatprep.subr.mxu0 0.0
    %268 = vmatpush1.msra.mxu0 0.0
    %269 = vmatprep.subr.mxu0 0.0
    %270 = vmatpush1.msra.mxu0 0.0
    %271 = vmatprep.subr.mxu0 0.0
    %272 = vmatpush1.msra.mxu0 0.0
    %273 = vmatprep.subr.mxu0 0.0
    %274 = vmatpush1.msra.mxu0 0.0
    %275 = vmatprep.subr.mxu0 0.0
    %276 = vmatpush1.msra.mxu0 0.0
    %277 = vmatprep.subr.mxu0 0.0
    %278 = vmatpush1.msra.mxu0 0.0
    %279 = vmatprep.subr.mxu0 0.0
    %280 = vmatpush1.msra.mxu0 0.0
    %281 = vmatprep.subr.mxu0 0.0
    %282 = vmatpush1.msra.mxu0 0.0
    %283 = vmatprep.subr.mxu0 0.0
    %284 = vmatpush1.msra.mxu0 0.0
    %285 = vmatprep.subr.mxu0 0.0
    %286 = vmatpush1.msra.mxu0 0.0
    %287 = vmatprep.subr.mxu0 0.0
    %288 = vmatpush1.msra.mxu0 0.0
    %289 = vmatprep.subr.mxu0 0.0
    %290 = vmatpush1.msra.mxu0 0.0
    %291 = vmatprep.subr.mxu0 0.0
    %292 = vmatpush1.msra.mxu0 0.0
    %293 = vmatprep.mubr.f32.mxu0 0.0
    %294 = vmatmul.mubr.f32.gmra.mrb[0].mxu0 %v140
    %v295 = vpop.f32.mrb[0].mxu0
    %v296 = vadd.f32 %v228, %v295
    %v297 = vpop.f32.mrb[0].mxu0
    %298 = vmatprep.mubr.f32.mxu0 0.0
    %299 = vmatmul.mubr.f32.gmra.mrb[0].mxu0 %v143
    %v300 = vpop.f32.mrb[0].mxu0
    %v301 = vadd.f32 %v228, %v300
    %v302 = vpop.f32.mrb[0].mxu0
    %303 = vdwg.mxu0
    %v304 = vld [vmem:[#allocation2 + $0x148] sm:$0xff]
    %v305 = vld [vmem:[#allocation2 + $0x150] sm:$0xff]
    %v306 = vld [vmem:[#allocation2 + $0x158] sm:$0xff]
    %v307 = vld [vmem:[#allocation2 + $0x160] sm:$0xff]
    %v308 = vld [vmem:[#allocation2 + $0x22a] sm:$0x1]
    %v309 = vlaneseq
    %v310 = vshrl.u32 %v309, 7
    %v311 = vsub.s32 0, %v310
    %v312 = vrot.slane %v308, %v311
    %313 = vmatprep.subr.mxu0 0.0
    %314 = vmatpush1.msra.mxu0 %v304
    %315 = vmatprep.subr.mxu0 0.0
    %316 = vmatpush1.msra.mxu0 %v305
    %317 = vmatprep.subr.mxu0 0.0
    %318 = vmatpush1.msra.mxu0 %v306
    %319 = vmatprep.subr.mxu0 0.0
    %320 = vmatpush1.msra.mxu0 %v307
    %321 = vmatprep.subr.mxu0 0.0
    %322 = vmatpush1.msra.mxu0 0.0
    %323 = vmatprep.subr.mxu0 0.0
    %324 = vmatpush1.msra.mxu0 0.0
    %325 = vmatprep.subr.mxu0 0.0
    %326 = vmatpush1.msra.mxu0 0.0
    %327 = vmatprep.subr.mxu0 0.0
    %328 = vmatpush1.msra.mxu0 0.0
    %329 = vmatprep.subr.mxu0 0.0
    %330 = vmatpush1.msra.mxu0 0.0
    %331 = vmatprep.subr.mxu0 0.0
    %332 = vmatpush1.msra.mxu0 0.0
    %333 = vmatprep.subr.mxu0 0.0
    %334 = vmatpush1.msra.mxu0 0.0
    %335 = vmatprep.subr.mxu0 0.0
    %336 = vmatpush1.msra.mxu0 0.0
    %337 = vmatprep.subr.mxu0 0.0
    %338 = vmatpush1.msra.mxu0 0.0
    %339 = vmatprep.subr.mxu0 0.0
    %340 = vmatpush1.msra.mxu0 0.0
    %341 = vmatprep.subr.mxu0 0.0
    %342 = vmatpush1.msra.mxu0 0.0
    %343 = vmatprep.subr.mxu0 0.0
    %344 = vmatpush1.msra.mxu0 0.0
    %345 = vmatprep.subr.mxu0 0.0
    %346 = vmatpush1.msra.mxu0 0.0
    %347 = vmatprep.subr.mxu0 0.0
    %348 = vmatpush1.msra.mxu0 0.0
    %349 = vmatprep.subr.mxu0 0.0
    %350 = vmatpush1.msra.mxu0 0.0
    %351 = vmatprep.subr.mxu0 0.0
    %352 = vmatpush1.msra.mxu0 0.0
    %353 = vmatprep.subr.mxu0 0.0
    %354 = vmatpush1.msra.mxu0 0.0
    %355 = vmatprep.subr.mxu0 0.0
    %356 = vmatpush1.msra.mxu0 0.0
    %357 = vmatprep.subr.mxu0 0.0
    %358 = vmatpush1.msra.mxu0 0.0
    %359 = vmatprep.subr.mxu0 0.0
    %360 = vmatpush1.msra.mxu0 0.0
    %361 = vmatprep.subr.mxu0 0.0
    %362 = vmatpush1.msra.mxu0 0.0
    %363 = vmatprep.subr.mxu0 0.0
    %364 = vmatpush1.msra.mxu0 0.0
    %365 = vmatprep.subr.mxu0 0.0
    %366 = vmatpush1.msra.mxu0 0.0
    %367 = vmatprep.subr.mxu0 0.0
    %368 = vmatpush1.msra.mxu0 0.0
    %369 = vmatprep.subr.mxu0 0.0
    %370 = vmatpush1.msra.mxu0 0.0
    %371 = vmatprep.subr.mxu0 0.0
    %372 = vmatpush1.msra.mxu0 0.0
    %373 = vmatprep.subr.mxu0 0.0
    %374 = vmatpush1.msra.mxu0 0.0
    %375 = vmatprep.subr.mxu0 0.0
    %376 = vmatpush1.msra.mxu0 0.0
    %377 = vmatprep.mubr.f32.mxu0 0.0
    %378 = vmatmul.mubr.f32.gmra.mrb[0].mxu0 %v140
    %v379 = vpop.f32.mrb[0].mxu0
    %v380 = vadd.f32 %v312, %v379
    %v381 = vpop.f32.mrb[0].mxu0
    %382 = vmatprep.mubr.f32.mxu0 0.0
    %383 = vmatmul.mubr.f32.gmra.mrb[0].mxu0 %v143
    %v384 = vpop.f32.mrb[0].mxu0
    %v385 = vadd.f32 %v312, %v384
    %v386 = vpop.f32.mrb[0].mxu0
    %387 = vdwg.mxu0
    %v388 = vmul.f32 %v296, %v27
    %v389 = vmul.f32 %v301, %v28
    %v390 = vmul.f32 %v296, %v29
    %v391 = vmul.f32 %v301, %v30
    %v392 = vmul.f32 %v380, %v27
    %v393 = vmul.f32 %v385, %v28
    %v394 = vmul.f32 %v380, %v29
    %v395 = vmul.f32 %v385, %v30
    %v397 = vsel %vm138, %v212, 0
    %v400 = vsel %vm138, %v217, 0
    %v403 = vsel %vm138, %v388, 0
    %v406 = vsel %vm138, %v389, 0
    %v409 = vsel %vm138, %v390, 0
    %v412 = vsel %vm138, %v391, 0
    %414 = vmatprep.subr.mxu0 0.0
    %415 = vmatpush1.xpose.msra.mxu0 %v403
    %416 = vmatprep.subr.mxu0 0.0
    %417 = vmatpush1.xpose.msra.mxu0 %v406
    %418 = vmatprep.subr.mxu0 0.0
    %419 = vmatpush1.xpose.msra.mxu0 %v409
    %420 = vmatprep.subr.mxu0 0.0
    %421 = vmatpush1.xpose.msra.mxu0 %v412
    %422 = vmatprep.subr.mxu0 0.0
    %423 = vmatpush1.xpose.msra.mxu0 0.0
    %424 = vmatprep.subr.mxu0 0.0
    %425 = vmatpush1.xpose.msra.mxu0 0.0
    %426 = vmatprep.subr.mxu0 0.0
    %427 = vmatpush1.xpose.msra.mxu0 0.0
    %428 = vmatprep.subr.mxu0 0.0
    %429 = vmatpush1.xpose.msra.mxu0 0.0
    %430 = vmatprep.subr.mxu0 0.0
    %431 = vmatpush1.xpose.msra.mxu0 0.0
    %432 = vmatprep.subr.mxu0 0.0
    %433 = vmatpush1.xpose.msra.mxu0 0.0
    %434 = vmatprep.subr.mxu0 0.0
    %435 = vmatpush1.xpose.msra.mxu0 0.0
    %436 = vmatprep.subr.mxu0 0.0
    %437 = vmatpush1.xpose.msra.mxu0 0.0
    %438 = vmatprep.subr.mxu0 0.0
    %439 = vmatpush1.xpose.msra.mxu0 0.0
    %440 = vmatprep.subr.mxu0 0.0
    %441 = vmatpush1.xpose.msra.mxu0 0.0
    %442 = vmatprep.subr.mxu0 0.0
    %443 = vmatpush1.xpose.msra.mxu0 0.0
    %444 = vmatprep.subr.mxu0 0.0
    %445 = vmatpush1.xpose.msra.mxu0 0.0
    %446 = vmatprep.subr.mxu0 0.0
    %447 = vmatpush1.xpose.msra.mxu0 0.0
    %448 = vmatprep.subr.mxu0 0.0
    %449 = vmatpush1.xpose.msra.mxu0 0.0
    %450 = vmatprep.subr.mxu0 0.0
    %451 = vmatpush1.xpose.msra.mxu0 0.0
    %452 = vmatprep.subr.mxu0 0.0
    %453 = vmatpush1.xpose.msra.mxu0 0.0
    %454 = vmatprep.subr.mxu0 0.0
    %455 = vmatpush1.xpose.msra.mxu0 0.0
    %456 = vmatprep.subr.mxu0 0.0
    %457 = vmatpush1.xpose.msra.mxu0 0.0
    %458 = vmatprep.subr.mxu0 0.0
    %459 = vmatpush1.xpose.msra.mxu0 0.0
    %460 = vmatprep.subr.mxu0 0.0
    %461 = vmatpush1.xpose.msra.mxu0 0.0
    %462 = vmatprep.subr.mxu0 0.0
    %463 = vmatpush1.xpose.msra.mxu0 0.0
    %464 = vmatprep.subr.mxu0 0.0
    %465 = vmatpush1.xpose.msra.mxu0 0.0
    %466 = vmatprep.subr.mxu0 0.0
    %467 = vmatpush1.xpose.msra.mxu0 0.0
    %468 = vmatprep.subr.mxu0 0.0
    %469 = vmatpush1.xpose.msra.mxu0 0.0
    %470 = vmatprep.subr.mxu0 0.0
    %471 = vmatpush1.xpose.msra.mxu0 0.0
    %472 = vmatprep.subr.mxu0 0.0
    %473 = vmatpush1.xpose.msra.mxu0 0.0
    %474 = vmatprep.subr.mxu0 0.0
    %475 = vmatpush1.xpose.msra.mxu0 0.0
    %476 = vmatprep.subr.mxu0 0.0
    %477 = vmatpush1.xpose.msra.mxu0 0.0
    %478 = vmatprep.mubr.f32.mxu0 0.0
    %479 = vmatmul.mubr.f32.gmra.mrb[0].mxu0 %v397
    %v480 = vpop.f32.mrb[0].mxu0
    %v481 = vadd.f32 %v25, %v480
    %v482 = vpop.f32.mrb[0].mxu0
    %483 = vmatprep.mubr.f32.mxu0 0.0
    %484 = vmatmul.mubr.f32.gmra.mrb[0].mxu0 %v400
    %v485 = vpop.f32.mrb[0].mxu0
    %v486 = vadd.f32 %v26, %v485
    %v487 = vpop.f32.mrb[0].mxu0
    %488 = vdwg.mxu0
    %v489 = vsel %vm138, %v481, -inf
    %490 = vmax.xlane.f32.xlu0 %v489
    %v491 = vpop.xlane.xlu0 %490
    %v492 = vsel %vm138, %v486, -inf
    %493 = vmax.xlane.f32.xlu0 %v492
    %v494 = vpop.xlane.xlu0 %493
    %v495 = vsub.f32 %v481, %v491
    %v496 = vsub.f32 %v486, %v494
    %v497 = vmul.f32 %v495, 1.442695
    %v498 = vpow.pop %v497
    %v499 = vmul.f32 %v496, 1.442695
    %v500 = vpow.pop %v499
    %v502 = vsel %vm138, %v498, 0
    %v505 = vsel %vm138, %v500, 0
    %507 = vmatprep.subr.mxu0 0.0
    %508 = vmatpush1.msra.mxu0 %v27
    %509 = vmatprep.subr.mxu0 0.0
    %510 = vmatpush1.msra.mxu0 %v28
    %511 = vmatprep.subr.mxu0 0.0
    %512 = vmatpush1.msra.mxu0 %v29
    %513 = vmatprep.subr.mxu0 0.0
    %514 = vmatpush1.msra.mxu0 %v30
    %515 = vmatprep.subr.mxu0 0.0
    %516 = vmatpush1.msra.mxu0 0.0
    %517 = vmatprep.subr.mxu0 0.0
    %518 = vmatpush1.msra.mxu0 0.0
    %519 = vmatprep.subr.mxu0 0.0
    %520 = vmatpush1.msra.mxu0 0.0
    %521 = vmatprep.subr.mxu0 0.0
    %522 = vmatpush1.msra.mxu0 0.0
    %523 = vmatprep.subr.mxu0 0.0
    %524 = vmatpush1.msra.mxu0 0.0
    %525 = vmatprep.subr.mxu0 0.0
    %526 = vmatpush1.msra.mxu0 0.0
    %527 = vmatprep.subr.mxu0 0.0
    %528 = vmatpush1.msra.mxu0 0.0
    %529 = vmatprep.subr.mxu0 0.0
    %530 = vmatpush1.msra.mxu0 0.0
    %531 = vmatprep.subr.mxu0 0.0
    %532 = vmatpush1.msra.mxu0 0.0
    %533 = vmatprep.subr.mxu0 0.0
    %534 = vmatpush1.msra.mxu0 0.0
    %535 = vmatprep.subr.mxu0 0.0
    %536 = vmatpush1.msra.mxu0 0.0
    %537 = vmatprep.subr.mxu0 0.0
    %538 = vmatpush1.msra.mxu0 0.0
    %539 = vmatprep.subr.mxu0 0.0
    %540 = vmatpush1.msra.mxu0 0.0
    %541 = vmatprep.subr.mxu0 0.0
    %542 = vmatpush1.msra.mxu0 0.0
    %543 = vmatprep.subr.mxu0 0.0
    %544 = vmatpush1.msra.mxu0 0.0
    %545 = vmatprep.subr.mxu0 0.0
    %546 = vmatpush1.msra.mxu0 0.0
    %547 = vmatprep.subr.mxu0 0.0
    %548 = vmatpush1.msra.mxu0 0.0
    %549 = vmatprep.subr.mxu0 0.0
    %550 = vmatpush1.msra.mxu0 0.0
    %551 = vmatprep.subr.mxu0 0.0
    %552 = vmatpush1.msra.mxu0 0.0
    %553 = vmatprep.subr.mxu0 0.0
    %554 = vmatpush1.msra.mxu0 0.0
    %555 = vmatprep.subr.mxu0 0.0
    %556 = vmatpush1.msra.mxu0 0.0
    %557 = vmatprep.subr.mxu0 0.0
    %558 = vmatpush1.msra.mxu0 0.0
    %559 = vmatprep.subr.mxu0 0.0
    %560 = vmatpush1.msra.mxu0 0.0
    %561 = vmatprep.subr.mxu0 0.0
    %562 = vmatpush1.msra.mxu0 0.0
    %563 = vmatprep.subr.mxu0 0.0
    %564 = vmatpush1.msra.mxu0 0.0
    %565 = vmatprep.subr.mxu0 0.0
    %566 = vmatpush1.msra.mxu0 0.0
    %567 = vmatprep.subr.mxu0 0.0
    %568 = vmatpush1.msra.mxu0 0.0
    %569 = vmatprep.subr.mxu0 0.0
    %570 = vmatpush1.msra.mxu0 0.0
    %571 = vmatprep.mubr.f32.mxu0 0.0
    %572 = vmatmul.mubr.f32.gmra.mrb[0].mxu0 %v502
    %v573 = vpop.f32.mrb[0].mxu0
    %v574 = vadd.f32 0.0, %v573
    %v575 = vpop.f32.mrb[0].mxu0
    %576 = vmatprep.mubr.f32.mxu0 0.0
    %577 = vmatmul.mubr.f32.gmra.mrb[0].mxu0 %v505
    %v578 = vpop.f32.mrb[0].mxu0
    %v579 = vadd.f32 0.0, %v578
    %v580 = vpop.f32.mrb[0].mxu0
    %581 = vdwg.mxu0
    %v582 = vrcp.pop %v574
    %v583 = vrcp.pop %v579
    %v584 = vmul.f32 %v498, %v582
    %v585 = vmul.f32 %v500, %v583
    %v587 = vsel %vm138, %v584, 0
    %v590 = vsel %vm138, %v585, 0
    %592 = vmatprep.subr.mxu0 0.0
    %593 = vmatpush1.msra.mxu0 %v392
    %594 = vmatprep.subr.mxu0 0.0
    %595 = vmatpush1.msra.mxu0 %v393
    %596 = vmatprep.subr.mxu0 0.0
    %597 = vmatpush1.msra.mxu0 %v394
    %598 = vmatprep.subr.mxu0 0.0
    %599 = vmatpush1.msra.mxu0 %v395
    %600 = vmatprep.subr.mxu0 0.0
    %601 = vmatpush1.msra.mxu0 0.0
    %602 = vmatprep.subr.mxu0 0.0
    %603 = vmatpush1.msra.mxu0 0.0
    %604 = vmatprep.subr.mxu0 0.0
    %605 = vmatpush1.msra.mxu0 0.0
    %606 = vmatprep.subr.mxu0 0.0
    %607 = vmatpush1.msra.mxu0 0.0
    %608 = vmatprep.subr.mxu0 0.0
    %609 = vmatpush1.msra.mxu0 0.0
    %610 = vmatprep.subr.mxu0 0.0
    %611 = vmatpush1.msra.mxu0 0.0
    %612 = vmatprep.subr.mxu0 0.0
    %613 = vmatpush1.msra.mxu0 0.0
    %614 = vmatprep.subr.mxu0 0.0
    %615 = vmatpush1.msra.mxu0 0.0
    %616 = vmatprep.subr.mxu0 0.0
    %617 = vmatpush1.msra.mxu0 0.0
    %618 = vmatprep.subr.mxu0 0.0
    %619 = vmatpush1.msra.mxu0 0.0
    %620 = vmatprep.subr.mxu0 0.0
    %621 = vmatpush1.msra.mxu0 0.0
    %622 = vmatprep.subr.mxu0 0.0
    %623 = vmatpush1.msra.mxu0 0.0
    %624 = vmatprep.subr.mxu0 0.0
    %625 = vmatpush1.msra.mxu0 0.0
    %626 = vmatprep.subr.mxu0 0.0
    %627 = vmatpush1.msra.mxu0 0.0
    %628 = vmatprep.subr.mxu0 0.0
    %629 = vmatpush1.msra.mxu0 0.0
    %630 = vmatprep.subr.mxu0 0.0
    %631 = vmatpush1.msra.mxu0 0.0
    %632 = vmatprep.subr.mxu0 0.0
    %633 = vmatpush1.msra.mxu0 0.0
    %634 = vmatprep.subr.mxu0 0.0
    %635 = vmatpush1.msra.mxu0 0.0
    %636 = vmatprep.subr.mxu0 0.0
    %637 = vmatpush1.msra.mxu0 0.0
    %638 = vmatprep.subr.mxu0 0.0
    %639 = vmatpush1.msra.mxu0 0.0
    %640 = vmatprep.subr.mxu0 0.0
    %641 = vmatpush1.msra.mxu0 0.0
    %642 = vmatprep.subr.mxu0 0.0
    %643 = vmatpush1.msra.mxu0 0.0
    %644 = vmatprep.subr.mxu0 0.0
    %645 = vmatpush1.msra.mxu0 0.0
    %646 = vmatprep.subr.mxu0 0.0
    %647 = vmatpush1.msra.mxu0 0.0
    %648 = vmatprep.subr.mxu0 0.0
    %649 = vmatpush1.msra.mxu0 0.0
    %650 = vmatprep.subr.mxu0 0.0
    %651 = vmatpush1.msra.mxu0 0.0
    %652 = vmatprep.subr.mxu0 0.0
    %653 = vmatpush1.msra.mxu0 0.0
    %654 = vmatprep.subr.mxu0 0.0
    %655 = vmatpush1.msra.mxu0 0.0
    %656 = vmatprep.mubr.f32.mxu0 0.0
    %657 = vmatmul.mubr.f32.gmra.mrb[0].mxu0 %v587
    %v658 = vpop.f32.mrb[0].mxu0
    %v659 = vadd.f32 0.0, %v658
    %v660 = vpop.f32.mrb[0].mxu0
    %661 = vmatprep.mubr.f32.mxu0 0.0
    %662 = vmatmul.mubr.f32.gmra.mrb[0].mxu0 %v590
    %v663 = vpop.f32.mrb[0].mxu0
    %v664 = vadd.f32 0.0, %v663
    %v665 = vpop.f32.mrb[0].mxu0
    %666 = vdwg.mxu0
    %v667 = vld [vmem:[#allocation2 + $0x168] sm:$0xff]
    %v668 = vld [vmem:[#allocation2 + $0x170] sm:$0xff]
    %v669 = vld [vmem:[#allocation2 + $0x178] sm:$0xff]
    %v670 = vld [vmem:[#allocation2 + $0x180] sm:$0xff]
    %v671 = vld [vmem:[#allocation2 + $0x22b] sm:$0x1]
    %v672 = vlaneseq
    %v673 = vshrl.u32 %v672, 7
    %v674 = vsub.s32 0, %v673
    %v675 = vrot.slane %v671, %v674
    %v677 = vsel %vm138, %v659, 0
    %v680 = vsel %vm138, %v664, 0
    %682 = vmatprep.subr.mxu0 0.0
    %683 = vmatpush1.msra.mxu0 %v667
    %684 = vmatprep.subr.mxu0 0.0
    %685 = vmatpush1.msra.mxu0 %v668
    %686 = vmatprep.subr.mxu0 0.0
    %687 = vmatpush1.msra.mxu0 %v669
    %688 = vmatprep.subr.mxu0 0.0
    %689 = vmatpush1.msra.mxu0 %v670
    %690 = vmatprep.subr.mxu0 0.0
    %691 = vmatpush1.msra.mxu0 0.0
    %692 = vmatprep.subr.mxu0 0.0
    %693 = vmatpush1.msra.mxu0 0.0
    %694 = vmatprep.subr.mxu0 0.0
    %695 = vmatpush1.msra.mxu0 0.0
    %696 = vmatprep.subr.mxu0 0.0
    %697 = vmatpush1.msra.mxu0 0.0
    %698 = vmatprep.subr.mxu0 0.0
    %699 = vmatpush1.msra.mxu0 0.0
    %700 = vmatprep.subr.mxu0 0.0
    %701 = vmatpush1.msra.mxu0 0.0
    %702 = vmatprep.subr.mxu0 0.0
    %703 = vmatpush1.msra.mxu0 0.0
    %704 = vmatprep.subr.mxu0 0.0
    %705 = vmatpush1.msra.mxu0 0.0
    %706 = vmatprep.subr.mxu0 0.0
    %707 = vmatpush1.msra.mxu0 0.0
    %708 = vmatprep.subr.mxu0 0.0
    %709 = vmatpush1.msra.mxu0 0.0
    %710 = vmatprep.subr.mxu0 0.0
    %711 = vmatpush1.msra.mxu0 0.0
    %712 = vmatprep.subr.mxu0 0.0
    %713 = vmatpush1.msra.mxu0 0.0
    %714 = vmatprep.subr.mxu0 0.0
    %715 = vmatpush1.msra.mxu0 0.0
    %716 = vmatprep.subr.mxu0 0.0
    %717 = vmatpush1.msra.mxu0 0.0
    %718 = vmatprep.subr.mxu0 0.0
    %719 = vmatpush1.msra.mxu0 0.0
    %720 = vmatprep.subr.mxu0 0.0
    %721 = vmatpush1.msra.mxu0 0.0
    %722 = vmatprep.subr.mxu0 0.0
    %723 = vmatpush1.msra.mxu0 0.0
    %724 = vmatprep.subr.mxu0 0.0
    %725 = vmatpush1.msra.mxu0 0.0
    %726 = vmatprep.subr.mxu0 0.0
    %727 = vmatpush1.msra.mxu0 0.0
    %728 = vmatprep.subr.mxu0 0.0
    %729 = vmatpush1.msra.mxu0 0.0
    %730 = vmatprep.subr.mxu0 0.0
    %731 = vmatpush1.msra.mxu0 0.0
    %732 = vmatprep.subr.mxu0 0.0
    %733 = vmatpush1.msra.mxu0 0.0
    %734 = vmatprep.subr.mxu0 0.0
    %735 = vmatpush1.msra.mxu0 0.0
    %736 = vmatprep.subr.mxu0 0.0
    %737 = vmatpush1.msra.mxu0 0.0
    %738 = vmatprep.subr.mxu0 0.0
    %739 = vmatpush1.msra.mxu0 0.0
    %740 = vmatprep.subr.mxu0 0.0
    %741 = vmatpush1.msra.mxu0 0.0
    %742 = vmatprep.subr.mxu0 0.0
    %743 = vmatpush1.msra.mxu0 0.0
    %744 = vmatprep.subr.mxu0 0.0
    %745 = vmatpush1.msra.mxu0 0.0
    %746 = vmatprep.mubr.f32.mxu0 0.0
    %747 = vmatmul.mubr.f32.gmra.mrb[0].mxu0 %v677
    %v748 = vpop.f32.mrb[0].mxu0
    %v749 = vadd.f32 %v675, %v748
    %v750 = vpop.f32.mrb[0].mxu0
    %751 = vmatprep.mubr.f32.mxu0 0.0
    %752 = vmatmul.mubr.f32.gmra.mrb[0].mxu0 %v680
    %v753 = vpop.f32.mrb[0].mxu0
    %v754 = vadd.f32 %v675, %v753
    %v755 = vpop.f32.mrb[0].mxu0
    %756 = vdwg.mxu0
    %v757 = vadd.f32 %v121, %v749
    %v758 = vadd.f32 %v126, %v754
    %v759 = vld [vmem:[#allocation2 + $0x22e] sm:$0x1]
    %v760 = vld [vmem:[#allocation2 + $0x22f] sm:$0x1]
    %v761 = vsel %vm138, %v757, 0.0
    %762 = vadd.xlane.f32.xlu0 %v761
    %v763 = vpop.xlane.xlu0 %762
    %v764 = vsel %vm138, %v758, 0.0
    %765 = vadd.xlane.f32.xlu0 %v764
    %v766 = vpop.xlane.xlu0 %765
    %v767 = vrcp.pop 32.0
    %v768 = vmul.f32 %v763, %v767
    %v769 = vmul.f32 %v766, %v767
    %v770 = vsub.f32 %v757, %v768
    %v771 = vsub.f32 %v758, %v769
    %v772 = vmul.f32 %v770, %v770
    %v773 = vmul.f32 %v771, %v771
    %v774 = vsel %vm138, %v772, 0.0
    %775 = vadd.xlane.f32.xlu0 %v774
    %v776 = vpop.xlane.xlu0 %775
    %v777 = vsel %vm138, %v773, 0.0
    %778 = vadd.xlane.f32.xlu0 %v777
    %v779 = vpop.xlane.xlu0 %778
    %v780 = vmul.f32 %v776, %v767
    %v781 = vmul.f32 %v779, %v767
    %v782 = vadd.f32 %v780, 1e-05
    %v783 = vadd.f32 %v781, 1e-05
    %v784 = vrsqrt.pop %v782
    %v785 = vrsqrt.pop %v783
    %v786 = vmul.f32 %v770, %v784
    %v787 = vmul.f32 %v771, %v785
    %v788 = vlaneseq
    %v789 = vshrl.u32 %v788, 7
    %v790 = vsub.s32 0, %v789
    %v791 = vrot.slane %v759, %v790
    %v792 = vmul.f32 %v786, %v791
    %v793 = vmul.f32 %v787, %v791
    %v794 = vlaneseq
    %v795 = vshrl.u32 %v794, 7
    %v796 = vsub.s32 0, %v795
    %v797 = vrot.slane %v760, %v796
    %v798 = vadd.f32 %v792, %v797
    %v799 = vadd.f32 %v793, %v797
    %v800 = vld [vmem:[#allocation2 + $0x188] sm:$0xff]
    %v801 = vld [vmem:[#allocation2 + $0x190] sm:$0xff]
    %v802 = vld [vmem:[#allocation2 + $0x198] sm:$0xff]
    %v803 = vld [vmem:[#allocation2 + $0x1a0] sm:$0xff]
    %v804 = vld [vmem:[#allocation2 + $0x22c] sm:$0x1]
    %v805 = vlaneseq
    %v806 = vshrl.u32 %v805, 7
    %v807 = vsub.s32 0, %v806
    %v808 = vrot.slane %v804, %v807
    %v810 = vsel %vm138, %v798, 0
    %v813 = vsel %vm138, %v799, 0
    %815 = vmatprep.subr.mxu0 0.0
    %816 = vmatpush1.msra.mxu0 %v800
    %817 = vmatprep.subr.mxu0 0.0
    %818 = vmatpush1.msra.mxu0 %v801
    %819 = vmatprep.subr.mxu0 0.0
    %820 = vmatpush1.msra.mxu0 %v802
    %821 = vmatprep.subr.mxu0 0.0
    %822 = vmatpush1.msra.mxu0 %v803
    %823 = vmatprep.subr.mxu0 0.0
    %824 = vmatpush1.msra.mxu0 0.0
    %825 = vmatprep.subr.mxu0 0.0
    %826 = vmatpush1.msra.mxu0 0.0
    %827 = vmatprep.subr.mxu0 0.0
    %828 = vmatpush1.msra.mxu0 0.0
    %829 = vmatprep.subr.mxu0 0.0
    %830 = vmatpush1.msra.mxu0 0.0
    %831 = vmatprep.subr.mxu0 0.0
    %832 = vmatpush1.msra.mxu0 0.0
    %833 = vmatprep.subr.mxu0 0.0
    %834 = vmatpush1.msra.mxu0 0.0
    %835 = vmatprep.subr.mxu0 0.0
    %836 = vmatpush1.msra.mxu0 0.0
    %837 = vmatprep.subr.mxu0 0.0
    %838 = vmatpush1.msra.mxu0 0.0
    %839 = vmatprep.subr.mxu0 0.0
    %840 = vmatpush1.msra.mxu0 0.0
    %841 = vmatprep.subr.mxu0 0.0
    %842 = vmatpush1.msra.mxu0 0.0
    %843 = vmatprep.subr.mxu0 0.0
    %844 = vmatpush1.msra.mxu0 0.0
    %845 = vmatprep.subr.mxu0 0.0
    %846 = vmatpush1.msra.mxu0 0.0
    %847 = vmatprep.subr.mxu0 0.0
    %848 = vmatpush1.msra.mxu0 0.0
    %849 = vmatprep.subr.mxu0 0.0
    %850 = vmatpush1.msra.mxu0 0.0
    %851 = vmatprep.subr.mxu0 0.0
    %852 = vmatpush1.msra.mxu0 0.0
    %853 = vmatprep.subr.mxu0 0.0
    %854 = vmatpush1.msra.mxu0 0.0
    %855 = vmatprep.subr.mxu0 0.0
    %856 = vmatpush1.msra.mxu0 0.0
    %857 = vmatprep.subr.mxu0 0.0
    %858 = vmatpush1.msra.mxu0 0.0
    %859 = vmatprep.subr.mxu0 0.0
    %860 = vmatpush1.msra.mxu0 0.0
    %861 = vmatprep.subr.mxu0 0.0
    %862 = vmatpush1.msra.mxu0 0.0
    %863 = vmatprep.subr.mxu0 0.0
    %864 = vmatpush1.msra.mxu0 0.0
    %865 = vmatprep.subr.mxu0 0.0
    %866 = vmatpush1.msra.mxu0 0.0
    %867 = vmatprep.subr.mxu0 0.0
    %868 = vmatpush1.msra.mxu0 0.0
    %869 = vmatprep.subr.mxu0 0.0
    %870 = vmatpush1.msra.mxu0 0.0
    %871 = vmatprep.subr.mxu0 0.0
    %872 = vmatpush1.msra.mxu0 0.0
    %873 = vmatprep.subr.mxu0 0.0
    %874 = vmatpush1.msra.mxu0 0.0
    %875 = vmatprep.subr.mxu0 0.0
    %876 = vmatpush1.msra.mxu0 0.0
    %877 = vmatprep.subr.mxu0 0.0
    %878 = vmatpush1.msra.mxu0 0.0
    %879 = vmatprep.mubr.f32.mxu0 0.0
    %880 = vmatmul.mubr.f32.gmra.mrb[0].mxu0 %v810
    %v881 = vpop.f32.mrb[0].mxu0
    %v882 = vadd.f32 %v808, %v881
    %v883 = vpop.f32.mrb[0].mxu0
    %884 = vmatprep.mubr.f32.mxu0 0.0
    %885 = vmatmul.mubr.f32.gmra.mrb[0].mxu0 %v813
    %v886 = vpop.f32.mrb[0].mxu0
    %v887 = vadd.f32 %v808, %v886
    %v888 = vpop.f32.mrb[0].mxu0
    %889 = vdwg.mxu0
    %v890 = vmax.f32 %v882, 0.0
    %v891 = vmax.f32 %v887, 0.0
    %v892 = vld [vmem:[#allocation2 + $0x1a8] sm:$0xff]
    %v893 = vld [vmem:[#allocation2 + $0x1b0] sm:$0xff]
    %v894 = vld [vmem:[#allocation2 + $0x1b8] sm:$0xff]
    %v895 = vld [vmem:[#allocation2 + $0x1c0] sm:$0xff]
    %v896 = vld [vmem:[#allocation2 + $0x1c8] sm:$0xff]
    %v897 = vld [vmem:[#allocation2 + $0x1d0] sm:$0xff]
    %v898 = vld [vmem:[#allocation2 + $0x1d8] sm:$0xff]
    %v899 = vld [vmem:[#allocation2 + $0x1e0] sm:$0xff]
    %v900 = vld [vmem:[#allocation2 + $0x1e8] sm:$0xff]
    %v901 = vld [vmem:[#allocation2 + $0x1f0] sm:$0xff]
    %v902 = vld [vmem:[#allocation2 + $0x1f8] sm:$0xff]
    %v903 = vld [vmem:[#allocation2 + $0x200] sm:$0xff]
    %v904 = vld [vmem:[#allocation2 + $0x208] sm:$0xff]
    %v905 = vld [vmem:[#allocation2 + $0x210] sm:$0xff]
    %v906 = vld [vmem:[#allocation2 + $0x218] sm:$0xff]
    %v907 = vld [vmem:[#allocation2 + $0x220] sm:$0xff]
    %v908 = vld [vmem:[#allocation2 + $0x22d] sm:$0x1]
    %v909 = vlaneseq
    %v910 = vshrl.u32 %v909, 7
    %v911 = vsub.s32 0, %v910
    %v912 = vrot.slane %v908, %v911
    %913 = vmatprep.subr.mxu0 0.0
    %914 = vmatpush1.msra.mxu0 %v892
    %915 = vmatprep.subr.mxu0 0.0
    %916 = vmatpush1.msra.mxu0 %v893
    %917 = vmatprep.subr.mxu0 0.0
    %918 = vmatpush1.msra.mxu0 %v894
    %919 = vmatprep.subr.mxu0 0.0
    %920 = vmatpush1.msra.mxu0 %v895
    %921 = vmatprep.subr.mxu0 0.0
    %922 = vmatpush1.msra.mxu0 %v896
    %923 = vmatprep.subr.mxu0 0.0
    %924 = vmatpush1.msra.mxu0 %v897
    %925 = vmatprep.subr.mxu0 0.0
    %926 = vmatpush1.msra.mxu0 %v898
    %927 = vmatprep.subr.mxu0 0.0
    %928 = vmatpush1.msra.mxu0 %v899
    %929 = vmatprep.subr.mxu0 0.0
    %930 = vmatpush1.msra.mxu0 %v900
    %931 = vmatprep.subr.mxu0 0.0
    %932 = vmatpush1.msra.mxu0 %v901
    %933 = vmatprep.subr.mxu0 0.0
    %934 = vmatpush1.msra.mxu0 %v902
    %935 = vmatprep.subr.mxu0 0.0
    %936 = vmatpush1.msra.mxu0 %v903
    %937 = vmatprep.subr.mxu0 0.0
    %938 = vmatpush1.msra.mxu0 %v904
    %939 = vmatprep.subr.mxu0 0.0
    %940 = vmatpush1.msra.mxu0 %v905
    %941 = vmatprep.subr.mxu0 0.0
    %942 = vmatpush1.msra.mxu0 %v906
    %943 = vmatprep.subr.mxu0 0.0
    %944 = vmatpush1.msra.mxu0 %v907
    %945 = vmatprep.subr.mxu0 0.0
    %946 = vmatpush1.msra.mxu0 0.0
    %947 = vmatprep.subr.mxu0 0.0
    %948 = vmatpush1.msra.mxu0 0.0
    %949 = vmatprep.subr.mxu0 0.0
    %950 = vmatpush1.msra.mxu0 0.0
    %951 = vmatprep.subr.mxu0 0.0
    %952 = vmatpush1.msra.mxu0 0.0
    %953 = vmatprep.subr.mxu0 0.0
    %954 = vmatpush1.msra.mxu0 0.0
    %955 = vmatprep.subr.mxu0 0.0
    %956 = vmatpush1.msra.mxu0 0.0
    %957 = vmatprep.subr.mxu0 0.0
    %958 = vmatpush1.msra.mxu0 0.0
    %959 = vmatprep.subr.mxu0 0.0
    %960 = vmatpush1.msra.mxu0 0.0
    %961 = vmatprep.subr.mxu0 0.0
    %962 = vmatpush1.msra.mxu0 0.0
    %963 = vmatprep.subr.mxu0 0.0
    %964 = vmatpush1.msra.mxu0 0.0
    %965 = vmatprep.subr.mxu0 0.0
    %966 = vmatpush1.msra.mxu0 0.0
    %967 = vmatprep.subr.mxu0 0.0
    %968 = vmatpush1.msra.mxu0 0.0
    %969 = vmatprep.subr.mxu0 0.0
    %970 = vmatpush1.msra.mxu0 0.0
    %971 = vmatprep.subr.mxu0 0.0
    %972 = vmatpush1.msra.mxu0 0.0
    %973 = vmatprep.subr.mxu0 0.0
    %974 = vmatpush1.msra.mxu0 0.0
    %975 = vmatprep.subr.mxu0 0.0
    %976 = vmatpush1.msra.mxu0 0.0
    %977 = vmatprep.mubr.f32.mxu0 0.0
    %978 = vmatmul.mubr.f32.gmra.mrb[0].mxu0 %v890
    %v979 = vpop.f32.mrb[0].mxu0
    %v980 = vadd.f32 %v912, %v979
    %v981 = vpop.f32.mrb[0].mxu0
    %982 = vmatprep.mubr.f32.mxu0 0.0
    %983 = vmatmul.mubr.f32.gmra.mrb[0].mxu0 %v891
    %v984 = vpop.f32.mrb[0].mxu0
    %v985 = vadd.f32 %v912, %v984
    %v986 = vpop.f32.mrb[0].mxu0
    %987 = vdwg.mxu0
    %v988 = vadd.f32 %v798, %v980
    %v989 = vadd.f32 %v799, %v985
    %v990 = vld [vmem:[#allocation2 + $0x230] sm:$0x1]
    %v991 = vld [vmem:[#allocation2 + $0x231] sm:$0x1]
    %v992 = vsel %vm138, %v988, 0.0
    %993 = vadd.xlane.f32.xlu0 %v992
    %v994 = vpop.xlane.xlu0 %993
    %v995 = vsel %vm138, %v989, 0.0
    %996 = vadd.xlane.f32.xlu0 %v995
    %v997 = vpop.xlane.xlu0 %996
    %v998 = vmul.f32 %v994, %v767
    %v999 = vmul.f32 %v997, %v767
    %v1000 = vsub.f32 %v988, %v998
    %v1001 = vsub.f32 %v989, %v999
    %v1002 = vmul.f32 %v1000, %v1000
    %v1003 = vmul.f32 %v1001, %v1001
    %v1004 = vsel %vm138, %v1002, 0.0
    %1005 = vadd.xlane.f32.xlu0 %v1004
    %v1006 = vpop.xlane.xlu0 %1005
    %v1007 = vsel %vm138, %v1003, 0.0
    %1008 = vadd.xlane.f32.xlu0 %v1007
    %v1009 = vpop.xlane.xlu0 %1008
    %v1010 = vmul.f32 %v1006, %v767
    %v1011 = vmul.f32 %v1009, %v767
    %v1012 = vadd.f32 %v1010, 1e-05
    %v1013 = vadd.f32 %v1011, 1e-05
    %v1014 = vrsqrt.pop %v1012
    %v1015 = vrsqrt.pop %v1013
    %v1016 = vmul.f32 %v1000, %v1014
    %v1017 = vmul.f32 %v1001, %v1015
    %v1018 = vlaneseq
    %v1019 = vshrl.u32 %v1018, 7
    %v1020 = vsub.s32 0, %v1019
    %v1021 = vrot.slane %v990, %v1020
    %v1022 = vmul.f32 %v1016, %v1021
    %v1023 = vmul.f32 %v1017, %v1021
    %v1024 = vlaneseq
    %v1025 = vshrl.u32 %v1024, 7
    %v1026 = vsub.s32 0, %v1025
    %v1027 = vrot.slane %v991, %v1026
    %v1028 = vadd.f32 %v1022, %v1027
    %v1029 = vadd.f32 %v1023, %v1027
    %v1030 = vld [vmem:[#allocation2 + $0x238] sm:$0xff]
    %v1031 = vld [vmem:[#allocation2 + $0x240] sm:$0xff]
    %v1032 = vld [vmem:[#allocation2 + $0x248] sm:$0xff]
    %v1033 = vld [vmem:[#allocation2 + $0x250] sm:$0xff]
    %v1034 = vld [vmem:[#allocation2 + $0x358] sm:$0x1]
    %v1035 = vlaneseq
    %v1036 = vshrl.u32 %v1035, 7
    %v1037 = vsub.s32 0, %v1036
    %v1038 = vrot.slane %v1034, %v1037
    %v1040 = vsel %vm138, %v1028, 0
    %v1043 = vsel %vm138, %v1029, 0
    %1045 = vmatprep.subr.mxu0 0.0
    %1046 = vmatpush1.msra.mxu0 %v1030
    %1047 = vmatprep.subr.mxu0 0.0
    %1048 = vmatpush1.msra.mxu0 %v1031
    %1049 = vmatprep.subr.mxu0 0.0
    %1050 = vmatpush1.msra.mxu0 %v1032
    %1051 = vmatprep.subr.mxu0 0.0
    %1052 = vmatpush1.msra.mxu0 %v1033
    %1053 = vmatprep.subr.mxu0 0.0
    %1054 = vmatpush1.msra.mxu0 0.0
    %1055 = vmatprep.subr.mxu0 0.0
    %1056 = vmatpush1.msra.mxu0 0.0
    %1057 = vmatprep.subr.mxu0 0.0
    %1058 = vmatpush1.msra.mxu0 0.0
    %1059 = vmatprep.subr.mxu0 0.0
    %1060 = vmatpush1.msra.mxu0 0.0
    %1061 = vmatprep.subr.mxu0 0.0
    %1062 = vmatpush1.msra.mxu0 0.0
    %1063 = vmatprep.subr.mxu0 0.0
    %1064 = vmatpush1.msra.mxu0 0.0
    %1065 = vmatprep.subr.mxu0 0.0
    %1066 = vmatpush1.msra.mxu0 0.0
    %1067 = vmatprep.subr.mxu0 0.0
    %1068 = vmatpush1.msra.mxu0 0.0
    %1069 = vmatprep.subr.mxu0 0.0
    %1070 = vmatpush1.msra.mxu0 0.0
    %1071 = vmatprep.subr.mxu0 0.0
    %1072 = vmatpush1.msra.mxu0 0.0
    %1073 = vmatprep.subr.mxu0 0.0
    %1074 = vmatpush1.msra.mxu0 0.0
    %1075 = vmatprep.subr.mxu0 0.0
    %1076 = vmatpush1.msra.mxu0 0.0
    %1077 = vmatprep.subr.mxu0 0.0
    %1078 = vmatpush1.msra.mxu0 0.0
    %1079 = vmatprep.subr.mxu0 0.0
    %1080 = vmatpush1.msra.mxu0 0.0
    %1081 = vmatprep.subr.mxu0 0.0
    %1082 = vmatpush1.msra.mxu0 0.0
    %1083 = vmatprep.subr.mxu0 0.0
    %1084 = vmatpush1.msra.mxu0 0.0
    %1085 = vmatprep.subr.mxu0 0.0
    %1086 = vmatpush1.msra.mxu0 0.0
    %1087 = vmatprep.subr.mxu0 0.0
    %1088 = vmatpush1.msra.mxu0 0.0
    %1089 = vmatprep.subr.mxu0 0.0
    %1090 = vmatpush1.msra.mxu0 0.0
    %1091 = vmatprep.subr.mxu0 0.0
    %1092 = vmatpush1.msra.mxu0 0.0
    %1093 = vmatprep.subr.mxu0 0.0
    %1094 = vmatpush1.msra.mxu0 0.0
    %1095 = vmatprep.subr.mxu0 0.0
    %1096 = vmatpush1.msra.mxu0 0.0
    %1097 = vmatprep.subr.mxu0 0.0
    %1098 = vmatpush1.msra.mxu0 0.0
    %1099 = vmatprep.subr.mxu0 0.0
    %1100 = vmatpush1.msra.mxu0 0.0
    %1101 = vmatprep.subr.mxu0 0.0
    %1102 = vmatpush1.msra.mxu0 0.0
    %1103 = vmatprep.subr.mxu0 0.0
    %1104 = vmatpush1.msra.mxu0 0.0
    %1105 = vmatprep.subr.mxu0 0.0
    %1106 = vmatpush1.msra.mxu0 0.0
    %1107 = vmatprep.subr.mxu0 0.0
    %1108 = vmatpush1.msra.mxu0 0.0
    %1109 = vmatprep.mubr.f32.mxu0 0.0
    %1110 = vmatmul.mubr.f32.gmra.mrb[0].mxu0 %v1040
    %v1111 = vpop.f32.mrb[0].mxu0
    %v1112 = vadd.f32 %v1038, %v1111
    %v1113 = vpop.f32.mrb[0].mxu0
    %1114 = vmatprep.mubr.f32.mxu0 0.0
    %1115 = vmatmul.mubr.f32.gmra.mrb[0].mxu0 %v1043
    %v1116 = vpop.f32.mrb[0].mxu0
    %v1117 = vadd.f32 %v1038, %v1116
    %v1118 = vpop.f32.mrb[0].mxu0
    %1119 = vdwg.mxu0
    %v1120 = vld [vmem:[#allocation2 + $0x258] sm:$0xff]
    %v1121 = vld [vmem:[#allocation2 + $0x260] sm:$0xff]
    %v1122 = vld [vmem:[#allocation2 + $0x268] sm:$0xff]
    %v1123 = vld [vmem:[#allocation2 + $0x270] sm:$0xff]
    %v1124 = vld [vmem:[#allocation2 + $0x359] sm:$0x1]
    %v1125 = vlaneseq
    %v1126 = vshrl.u32 %v1125, 7
    %v1127 = vsub.s32 0, %v1126
    %v1128 = vrot.slane %v1124, %v1127
    %1129 = vmatprep.subr.mxu0 0.0
    %1130 = vmatpush1.msra.mxu0 %v1120
    %1131 = vmatprep.subr.mxu0 0.0
    %1132 = vmatpush1.msra.mxu0 %v1121
    %1133 = vmatprep.subr.mxu0 0.0
    %1134 = vmatpush1.msra.mxu0 %v1122
    %1135 = vmatprep.subr.mxu0 0.0
    %1136 = vmatpush1.msra.mxu0 %v1123
    %1137 = vmatprep.subr.mxu0 0.0
    %1138 = vmatpush1.msra.mxu0 0.0
    %1139 = vmatprep.subr.mxu0 0.0
    %1140 = vmatpush1.msra.mxu0 0.0
    %1141 = vmatprep.subr.mxu0 0.0
    %1142 = vmatpush1.msra.mxu0 0.0
    %1143 = vmatprep.subr.mxu0 0.0
    %1144 = vmatpush1.msra.mxu0 0.0
    %1145 = vmatprep.subr.mxu0 0.0
    %1146 = vmatpush1.msra.mxu0 0.0
    %1147 = vmatprep.subr.mxu0 0.0
    %1148 = vmatpush1.msra.mxu0 0.0
    %1149 = vmatprep.subr.mxu0 0.0
    %1150 = vmatpush1.msra.mxu0 0.0
    %1151 = vmatprep.subr.mxu0 0.0
    %1152 = vmatpush1.msra.mxu0 0.0
    %1153 = vmatprep.subr.mxu0 0.0
    %1154 = vmatpush1.msra.mxu0 0.0
    %1155 = vmatprep.subr.mxu0 0.0
    %1156 = vmatpush1.msra.mxu0 0.0
    %1157 = vmatprep.subr.mxu0 0.0
    %1158 = vmatpush1.msra.mxu0 0.0
    %1159 = vmatprep.subr.mxu0 0.0
    %1160 = vmatpush1.msra.mxu0 0.0
    %1161 = vmatprep.subr.mxu0 0.0
    %1162 = vmatpush1.msra.mxu0 0.0
    %1163 = vmatprep.subr.mxu0 0.0
    %1164 = vmatpush1.msra.mxu0 0.0
    %1165 = vmatprep.subr.mxu0 0.0
    %1166 = vmatpush1.msra.mxu0 0.0
    %1167 = vmatprep.subr.mxu0 0.0
    %1168 = vmatpush1.msra.mxu0 0.0
    %1169 = vmatprep.subr.mxu0 0.0
    %1170 = vmatpush1.msra.mxu0 0.0
    %1171 = vmatprep.subr.mxu0 0.0
    %1172 = vmatpush1.msra.mxu0 0.0
    %1173 = vmatprep.subr.mxu0 0.0
    %1174 = vmatpush1.msra.mxu0 0.0
    %1175 = vmatprep.subr.mxu0 0.0
    %1176 = vmatpush1.msra.mxu0 0.0
    %1177 = vmatprep.subr.mxu0 0.0
    %1178 = vmatpush1.msra.mxu0 0.0
    %1179 = vmatprep.subr.mxu0 0.0
    %1180 = vmatpush1.msra.mxu0 0.0
    %1181 = vmatprep.subr.mxu0 0.0
    %1182 = vmatpush1.msra.mxu0 0.0
    %1183 = vmatprep.subr.mxu0 0.0
    %1184 = vmatpush1.msra.mxu0 0.0
    %1185 = vmatprep.subr.mxu0 0.0
    %1186 = vmatpush1.msra.mxu0 0.0
    %1187 = vmatprep.subr.mxu0 0.0
    %1188 = vmatpush1.msra.mxu0 0.0
    %1189 = vmatprep.subr.mxu0 0.0
    %1190 = vmatpush1.msra.mxu0 0.0
    %1191 = vmatprep.subr.mxu0 0.0
    %1192 = vmatpush1.msra.mxu0 0.0
    %1193 = vmatprep.mubr.f32.mxu0 0.0
    %1194 = vmatmul.mubr.f32.gmra.mrb[0].mxu0 %v1040
    %v1195 = vpop.f32.mrb[0].mxu0
    %v1196 = vadd.f32 %v1128, %v1195
    %v1197 = vpop.f32.mrb[0].mxu0
    %1198 = vmatprep.mubr.f32.mxu0 0.0
    %1199 = vmatmul.mubr.f32.gmra.mrb[0].mxu0 %v1043
    %v1200 = vpop.f32.mrb[0].mxu0
    %v1201 = vadd.f32 %v1128, %v1200
    %v1202 = vpop.f32.mrb[0].mxu0
    %1203 = vdwg.mxu0
    %v1204 = vld [vmem:[#allocation2 + $0x278] sm:$0xff]
    %v1205 = vld [vmem:[#allocation2 + $0x280] sm:$0xff]
    %v1206 = vld [vmem:[#allocation2 + $0x288] sm:$0xff]
    %v1207 = vld [vmem:[#allocation2 + $0x290] sm:$0xff]
    %v1208 = vld [vmem:[#allocation2 + $0x35a] sm:$0x1]
    %v1209 = vlaneseq
    %v1210 = vshrl.u32 %v1209, 7
    %v1211 = vsub.s32 0, %v1210
    %v1212 = vrot.slane %v1208, %v1211
    %1213 = vmatprep.subr.mxu0 0.0
    %1214 = vmatpush1.msra.mxu0 %v1204
    %1215 = vmatprep.subr.mxu0 0.0
    %1216 = vmatpush1.msra.mxu0 %v1205
    %1217 = vmatprep.subr.mxu0 0.0
    %1218 = vmatpush1.msra.mxu0 %v1206
    %1219 = vmatprep.subr.mxu0 0.0
    %1220 = vmatpush1.msra.mxu0 %v1207
    %1221 = vmatprep.subr.mxu0 0.0
    %1222 = vmatpush1.msra.mxu0 0.0
    %1223 = vmatprep.subr.mxu0 0.0
    %1224 = vmatpush1.msra.mxu0 0.0
    %1225 = vmatprep.subr.mxu0 0.0
    %1226 = vmatpush1.msra.mxu0 0.0
    %1227 = vmatprep.subr.mxu0 0.0
    %1228 = vmatpush1.msra.mxu0 0.0
    %1229 = vmatprep.subr.mxu0 0.0
    %1230 = vmatpush1.msra.mxu0 0.0
    %1231 = vmatprep.subr.mxu0 0.0
    %1232 = vmatpush1.msra.mxu0 0.0
    %1233 = vmatprep.subr.mxu0 0.0
    %1234 = vmatpush1.msra.mxu0 0.0
    %1235 = vmatprep.subr.mxu0 0.0
    %1236 = vmatpush1.msra.mxu0 0.0
    %1237 = vmatprep.subr.mxu0 0.0
    %1238 = vmatpush1.msra.mxu0 0.0
    %1239 = vmatprep.subr.mxu0 0.0
    %1240 = vmatpush1.msra.mxu0 0.0
    %1241 = vmatprep.subr.mxu0 0.0
    %1242 = vmatpush1.msra.mxu0 0.0
    %1243 = vmatprep.subr.mxu0 0.0
    %1244 = vmatpush1.msra.mxu0 0.0
    %1245 = vmatprep.subr.mxu0 0.0
    %1246 = vmatpush1.msra.mxu0 0.0
    %1247 = vmatprep.subr.mxu0 0.0
    %1248 = vmatpush1.msra.mxu0 0.0
    %1249 = vmatprep.subr.mxu0 0.0
    %1250 = vmatpush1.msra.mxu0 0.0
    %1251 = vmatprep.subr.mxu0 0.0
    %1252 = vmatpush1.msra.mxu0 0.0
    %1253 = vmatprep.subr.mxu0 0.0
    %1254 = vmatpush1.msra.mxu0 0.0
    %1255 = vmatprep.subr.mxu0 0.0
    %1256 = vmatpush1.msra.mxu0 0.0
    %1257 = vmatprep.subr.mxu0 0.0
    %1258 = vmatpush1.msra.mxu0 0.0
    %1259 = vmatprep.subr.mxu0 0.0
    %1260 = vmatpush1.msra.mxu0 0.0
    %1261 = vmatprep.subr.mxu0 0.0
    %1262 = vmatpush1.msra.mxu0 0.0
    %1263 = vmatprep.subr.mxu0 0.0
    %1264 = vmatpush1.msra.mxu0 0.0
    %1265 = vmatprep.subr.mxu0 0.0
    %1266 = vmatpush1.msra.mxu0 0.0
    %1267 = vmatprep.subr.mxu0 0.0
    %1268 = vmatpush1.msra.mxu0 0.0
    %1269 = vmatprep.subr.mxu0 0.0
    %1270 = vmatpush1.msra.mxu0 0.0
    %1271 = vmatprep.subr.mxu0 0.0
    %1272 = vmatpush1.msra.mxu0 0.0
    %1273 = vmatprep.subr.mxu0 0.0
    %1274 = vmatpush1.msra.mxu0 0.0
    %1275 = vmatprep.subr.mxu0 0.0
    %1276 = vmatpush1.msra.mxu0 0.0
    %1277 = vmatprep.mubr.f32.mxu0 0.0
    %1278 = vmatmul.mubr.f32.gmra.mrb[0].mxu0 %v1040
    %v1279 = vpop.f32.mrb[0].mxu0
    %v1280 = vadd.f32 %v1212, %v1279
    %v1281 = vpop.f32.mrb[0].mxu0
    %1282 = vmatprep.mubr.f32.mxu0 0.0
    %1283 = vmatmul.mubr.f32.gmra.mrb[0].mxu0 %v1043
    %v1284 = vpop.f32.mrb[0].mxu0
    %v1285 = vadd.f32 %v1212, %v1284
    %v1286 = vpop.f32.mrb[0].mxu0
    %1287 = vdwg.mxu0
    %v1288 = vmul.f32 %v1196, %v27
    %v1289 = vmul.f32 %v1201, %v28
    %v1290 = vmul.f32 %v1196, %v29
    %v1291 = vmul.f32 %v1201, %v30
    %v1292 = vmul.f32 %v1280, %v27
    %v1293 = vmul.f32 %v1285, %v28
    %v1294 = vmul.f32 %v1280, %v29
    %v1295 = vmul.f32 %v1285, %v30
    %v1297 = vsel %vm138, %v1112, 0
    %v1300 = vsel %vm138, %v1117, 0
    %v1303 = vsel %vm138, %v1288, 0
    %v1306 = vsel %vm138, %v1289, 0
    %v1309 = vsel %vm138, %v1290, 0
    %v1312 = vsel %vm138, %v1291, 0
    %1314 = vmatprep.subr.mxu0 0.0
    %1315 = vmatpush1.xpose.msra.mxu0 %v1303
    %1316 = vmatprep.subr.mxu0 0.0
    %1317 = vmatpush1.xpose.msra.mxu0 %v1306
    %1318 = vmatprep.subr.mxu0 0.0
    %1319 = vmatpush1.xpose.msra.mxu0 %v1309
    %1320 = vmatprep.subr.mxu0 0.0
    %1321 = vmatpush1.xpose.msra.mxu0 %v1312
    %1322 = vmatprep.subr.mxu0 0.0
    %1323 = vmatpush1.xpose.msra.mxu0 0.0
    %1324 = vmatprep.subr.mxu0 0.0
    %1325 = vmatpush1.xpose.msra.mxu0 0.0
    %1326 = vmatprep.subr.mxu0 0.0
    %1327 = vmatpush1.xpose.msra.mxu0 0.0
    %1328 = vmatprep.subr.mxu0 0.0
    %1329 = vmatpush1.xpose.msra.mxu0 0.0
    %1330 = vmatprep.subr.mxu0 0.0
    %1331 = vmatpush1.xpose.msra.mxu0 0.0
    %1332 = vmatprep.subr.mxu0 0.0
    %1333 = vmatpush1.xpose.msra.mxu0 0.0
    %1334 = vmatprep.subr.mxu0 0.0
    %1335 = vmatpush1.xpose.msra.mxu0 0.0
    %1336 = vmatprep.subr.mxu0 0.0
    %1337 = vmatpush1.xpose.msra.mxu0 0.0
    %1338 = vmatprep.subr.mxu0 0.0
    %1339 = vmatpush1.xpose.msra.mxu0 0.0
    %1340 = vmatprep.subr.mxu0 0.0
    %1341 = vmatpush1.xpose.msra.mxu0 0.0
    %1342 = vmatprep.subr.mxu0 0.0
    %1343 = vmatpush1.xpose.msra.mxu0 0.0
    %1344 = vmatprep.subr.mxu0 0.0
    %1345 = vmatpush1.xpose.msra.mxu0 0.0
    %1346 = vmatprep.subr.mxu0 0.0
    %1347 = vmatpush1.xpose.msra.mxu0 0.0
    %1348 = vmatprep.subr.mxu0 0.0
    %1349 = vmatpush1.xpose.msra.mxu0 0.0
    %1350 = vmatprep.subr.mxu0 0.0
    %1351 = vmatpush1.xpose.msra.mxu0 0.0
    %1352 = vmatprep.subr.mxu0 0.0
    %1353 = vmatpush1.xpose.msra.mxu0 0.0
    %1354 = vmatprep.subr.mxu0 0.0
    %1355 = vmatpush1.xpose.msra.mxu0 0.0
    %1356 = vmatprep.subr.mxu0 0.0
    %1357 = vmatpush1.xpose.msra.mxu0 0.0
    %1358 = vmatprep.subr.mxu0 0.0
    %1359 = vmatpush1.xpose.msra.mxu0 0.0
    %1360 = vmatprep.subr.mxu0 0.0
    %1361 = vmatpush1.xpose.msra.mxu0 0.0
    %1362 = vmatprep.subr.mxu0 0.0
    %1363 = vmatpush1.xpose.msra.mxu0 0.0
    %1364 = vmatprep.subr.mxu0 0.0
    %1365 = vmatpush1.xpose.msra.mxu0 0.0
    %1366 = vmatprep.subr.mxu0 0.0
    %1367 = vmatpush1.xpose.msra.mxu0 0.0
    %1368 = vmatprep.subr.mxu0 0.0
    %1369 = vmatpush1.xpose.msra.mxu0 0.0
    %1370 = vmatprep.subr.mxu0 0.0
    %1371 = vmatpush1.xpose.msra.mxu0 0.0
    %1372 = vmatprep.subr.mxu0 0.0
    %1373 = vmatpush1.xpose.msra.mxu0 0.0
    %1374 = vmatprep.subr.mxu0 0.0
    %1375 = vmatpush1.xpose.msra.mxu0 0.0
    %1376 = vmatprep.subr.mxu0 0.0
    %1377 = vmatpush1.xpose.msra.mxu0 0.0
    %1378 = vmatprep.mubr.f32.mxu0 0.0
    %1379 = vmatmul.mubr.f32.gmra.mrb[0].mxu0 %v1297
    %v1380 = vpop.f32.mrb[0].mxu0
    %v1381 = vadd.f32 %v25, %v1380
    %v1382 = vpop.f32.mrb[0].mxu0
    %1383 = vmatprep.mubr.f32.mxu0 0.0
    %1384 = vmatmul.mubr.f32.gmra.mrb[0].mxu0 %v1300
    %v1385 = vpop.f32.mrb[0].mxu0
    %v1386 = vadd.f32 %v26, %v1385
    %v1387 = vpop.f32.mrb[0].mxu0
    %1388 = vdwg.mxu0
    %v1389 = vsel %vm138, %v1381, -inf
    %1390 = vmax.xlane.f32.xlu0 %v1389
    %v1391 = vpop.xlane.xlu0 %1390
    %v1392 = vsel %vm138, %v1386, -inf
    %1393 = vmax.xlane.f32.xlu0 %v1392
    %v1394 = vpop.xlane.xlu0 %1393
    %v1395 = vsub.f32 %v1381, %v1391
    %v1396 = vsub.f32 %v1386, %v1394
    %v1397 = vmul.f32 %v1395, 1.442695
    %v1398 = vpow.pop %v1397
    %v1399 = vmul.f32 %v1396, 1.442695
    %v1400 = vpow.pop %v1399
    %v1402 = vsel %vm138, %v1398, 0
    %v1405 = vsel %vm138, %v1400, 0
    %1407 = vmatprep.subr.mxu0 0.0
    %1408 = vmatpush1.msra.mxu0 %v27
    %1409 = vmatprep.subr.mxu0 0.0
    %1410 = vmatpush1.msra.mxu0 %v28
    %1411 = vmatprep.subr.mxu0 0.0
    %1412 = vmatpush1.msra.mxu0 %v29
    %1413 = vmatprep.subr.mxu0 0.0
    %1414 = vmatpush1.msra.mxu0 %v30
    %1415 = vmatprep.subr.mxu0 0.0
    %1416 = vmatpush1.msra.mxu0 0.0
    %1417 = vmatprep.subr.mxu0 0.0
    %1418 = vmatpush1.msra.mxu0 0.0
    %1419 = vmatprep.subr.mxu0 0.0
    %1420 = vmatpush1.msra.mxu0 0.0
    %1421 = vmatprep.subr.mxu0 0.0
    %1422 = vmatpush1.msra.mxu0 0.0
    %1423 = vmatprep.subr.mxu0 0.0
    %1424 = vmatpush1.msra.mxu0 0.0
    %1425 = vmatprep.subr.mxu0 0.0
    %1426 = vmatpush1.msra.mxu0 0.0
    %1427 = vmatprep.subr.mxu0 0.0
    %1428 = vmatpush1.msra.mxu0 0.0
    %1429 = vmatprep.subr.mxu0 0.0
    %1430 = vmatpush1.msra.mxu0 0.0
    %1431 = vmatprep.subr.mxu0 0.0
    %1432 = vmatpush1.msra.mxu0 0.0
    %1433 = vmatprep.subr.mxu0 0.0
    %1434 = vmatpush1.msra.mxu0 0.0
    %1435 = vmatprep.subr.mxu0 0.0
    %1436 = vmatpush1.msra.mxu0 0.0
    %1437 = vmatprep.subr.mxu0 0.0
    %1438 = vmatpush1.msra.mxu0 0.0
    %1439 = vmatprep.subr.mxu0 0.0
    %1440 = vmatpush1.msra.mxu0 0.0
    %1441 = vmatprep.subr.mxu0 0.0
    %1442 = vmatpush1.msra.mxu0 0.0
    %1443 = vmatprep.subr.mxu0 0.0
    %1444 = vmatpush1.msra.mxu0 0.0
    %1445 = vmatprep.subr.mxu0 0.0
    %1446 = vmatpush1.msra.mxu0 0.0
    %1447 = vmatprep.subr.mxu0 0.0
    %1448 = vmatpush1.msra.mxu0 0.0
    %1449 = vmatprep.subr.mxu0 0.0
    %1450 = vmatpush1.msra.mxu0 0.0
    %1451 = vmatprep.subr.mxu0 0.0
    %1452 = vmatpush1.msra.mxu0 0.0
    %1453 = vmatprep.subr.mxu0 0.0
    %1454 = vmatpush1.msra.mxu0 0.0
    %1455 = vmatprep.subr.mxu0 0.0
    %1456 = vmatpush1.msra.mxu0 0.0
    %1457 = vmatprep.subr.mxu0 0.0
    %1458 = vmatpush1.msra.mxu0 0.0
    %1459 = vmatprep.subr.mxu0 0.0
    %1460 = vmatpush1.msra.mxu0 0.0
    %1461 = vmatprep.subr.mxu0 0.0
    %1462 = vmatpush1.msra.mxu0 0.0
    %1463 = vmatprep.subr.mxu0 0.0
    %1464 = vmatpush1.msra.mxu0 0.0
    %1465 = vmatprep.subr.mxu0 0.0
    %1466 = vmatpush1.msra.mxu0 0.0
    %1467 = vmatprep.subr.mxu0 0.0
    %1468 = vmatpush1.msra.mxu0 0.0
    %1469 = vmatprep.subr.mxu0 0.0
    %1470 = vmatpush1.msra.mxu0 0.0
    %1471 = vmatprep.mubr.f32.mxu0 0.0
    %1472 = vmatmul.mubr.f32.gmra.mrb[0].mxu0 %v1402
    %v1473 = vpop.f32.mrb[0].mxu0
    %v1474 = vadd.f32 0.0, %v1473
    %v1475 = vpop.f32.mrb[0].mxu0
    %1476 = vmatprep.mubr.f32.mxu0 0.0
    %1477 = vmatmul.mubr.f32.gmra.mrb[0].mxu0 %v1405
    %v1478 = vpop.f32.mrb[0].mxu0
    %v1479 = vadd.f32 0.0, %v1478
    %v1480 = vpop.f32.mrb[0].mxu0
    %1481 = vdwg.mxu0
    %v1482 = vrcp.pop %v1474
    %v1483 = vrcp.pop %v1479
    %v1484 = vmul.f32 %v1398, %v1482
    %v1485 = vmul.f32 %v1400, %v1483
    %v1487 = vsel %vm138, %v1484, 0
    %v1490 = vsel %vm138, %v1485, 0
    %1492 = vmatprep.subr.mxu0 0.0
    %1493 = vmatpush1.msra.mxu0 %v1292
    %1494 = vmatprep.subr.mxu0 0.0
    %1495 = vmatpush1.msra.mxu0 %v1293
    %1496 = vmatprep.subr.mxu0 0.0
    %1497 = vmatpush1.msra.mxu0 %v1294
    %1498 = vmatprep.subr.mxu0 0.0
    %1499 = vmatpush1.msra.mxu0 %v1295
    %1500 = vmatprep.subr.mxu0 0.0
    %1501 = vmatpush1.msra.mxu0 0.0
    %1502 = vmatprep.subr.mxu0 0.0
    %1503 = vmatpush1.msra.mxu0 0.0
    %1504 = vmatprep.subr.mxu0 0.0
    %1505 = vmatpush1.msra.mxu0 0.0
    %1506 = vmatprep.subr.mxu0 0.0
    %1507 = vmatpush1.msra.mxu0 0.0
    %1508 = vmatprep.subr.mxu0 0.0
    %1509 = vmatpush1.msra.mxu0 0.0
    %1510 = vmatprep.subr.mxu0 0.0
    %1511 = vmatpush1.msra.mxu0 0.0
    %1512 = vmatprep.subr.mxu0 0.0
    %1513 = vmatpush1.msra.mxu0 0.0
    %1514 = vmatprep.subr.mxu0 0.0
    %1515 = vmatpush1.msra.mxu0 0.0
    %1516 = vmatprep.subr.mxu0 0.0
    %1517 = vmatpush1.msra.mxu0 0.0
    %1518 = vmatprep.subr.mxu0 0.0
    %1519 = vmatpush1.msra.mxu0 0.0
    %1520 = vmatprep.subr.mxu0 0.0
    %1521 = vmatpush1.msra.mxu0 0.0
    %1522 = vmatprep.subr.mxu0 0.0
    %1523 = vmatpush1.msra.mxu0 0.0
    %1524 = vmatprep.subr.mxu0 0.0
    %1525 = vmatpush1.msra.mxu0 0.0
    %1526 = vmatprep.subr.mxu0 0.0
    %1527 = vmatpush1.msra.mxu0 0.0
    %1528 = vmatprep.subr.mxu0 0.0
    %1529 = vmatpush1.msra.mxu0 0.0
    %1530 = vmatprep.subr.mxu0 0.0
    %1531 = vmatpush1.msra.mxu0 0.0
    %1532 = vmatprep.subr.mxu0 0.0
    %1533 = vmatpush1.msra.mxu0 0.0
    %1534 = vmatprep.subr.mxu0 0.0
    %1535 = vmatpush1.msra.mxu0 0.0
    %1536 = vmatprep.subr.mxu0 0.0
    %1537 = vmatpush1.msra.mxu0 0.0
    %1538 = vmatprep.subr.mxu0 0.0
    %1539 = vmatpush1.msra.mxu0 0.0
    %1540 = vmatprep.subr.mxu0 0.0
    %1541 = vmatpush1.msra.mxu0 0.0
    %1542 = vmatprep.subr.mxu0 0.0
    %1543 = vmatpush1.msra.mxu0 0.0
    %1544 = vmatprep.subr.mxu0 0.0
    %1545 = vmatpush1.msra.mxu0 0.0
    %1546 = vmatprep.subr.mxu0 0.0
    %1547 = vmatpush1.msra.mxu0 0.0
    %1548 = vmatprep.subr.mxu0 0.0
    %1549 = vmatpush1.msra.mxu0 0.0
    %1550 = vmatprep.subr.mxu0 0.0
    %1551 = vmatpush1.msra.mxu0 0.0
    %1552 = vmatprep.subr.mxu0 0.0
    %1553 = vmatpush1.msra.mxu0 0.0
    %1554 = vmatprep.subr.mxu0 0.0
    %1555 = vmatpush1.msra.mxu0 0.0
    %1556 = vmatprep.mubr.f32.mxu0 0.0
    %1557 = vmatmul.mubr.f32.gmra.mrb[0].mxu0 %v1487
    %v1558 = vpop.f32.mrb[0].mxu0
    %v1559 = vadd.f32 0.0, %v1558
    %v1560 = vpop.f32.mrb[0].mxu0
    %1561 = vmatprep.mubr.f32.mxu0 0.0
    %1562 = vmatmul.mubr.f32.gmra.mrb[0].mxu0 %v1490
    %v1563 = vpop.f32.mrb[0].mxu0
    %v1564 = vadd.f32 0.0, %v1563
    %v1565 = vpop.f32.mrb[0].mxu0
    %1566 = vdwg.mxu0
    %v1567 = vld [vmem:[#allocation2 + $0x298] sm:$0xff]
    %v1568 = vld [vmem:[#allocation2 + $0x2a0] sm:$0xff]
    %v1569 = vld [vmem:[#allocation2 + $0x2a8] sm:$0xff]
    %v1570 = vld [vmem:[#allocation2 + $0x2b0] sm:$0xff]
    %v1571 = vld [vmem:[#allocation2 + $0x35b] sm:$0x1]
    %v1572 = vlaneseq
    %v1573 = vshrl.u32 %v1572, 7
    %v1574 = vsub.s32 0, %v1573
    %v1575 = vrot.slane %v1571, %v1574
    %v1577 = vsel %vm138, %v1559, 0
    %v1580 = vsel %vm138, %v1564, 0
    %1582 = vmatprep.subr.mxu0 0.0
    %1583 = vmatpush1.msra.mxu0 %v1567
    %1584 = vmatprep.subr.mxu0 0.0
    %1585 = vmatpush1.msra.mxu0 %v1568
    %1586 = vmatprep.subr.mxu0 0.0
    %1587 = vmatpush1.msra.mxu0 %v1569
    %1588 = vmatprep.subr.mxu0 0.0
    %1589 = vmatpush1.msra.mxu0 %v1570
    %1590 = vmatprep.subr.mxu0 0.0
    %1591 = vmatpush1.msra.mxu0 0.0
    %1592 = vmatprep.subr.mxu0 0.0
    %1593 = vmatpush1.msra.mxu0 0.0
    %1594 = vmatprep.subr.mxu0 0.0
    %1595 = vmatpush1.msra.mxu0 0.0
    %1596 = vmatprep.subr.mxu0 0.0
    %1597 = vmatpush1.msra.mxu0 0.0
    %1598 = vmatprep.subr.mxu0 0.0
    %1599 = vmatpush1.msra.mxu0 0.0
    %1600 = vmatprep.subr.mxu0 0.0
    %1601 = vmatpush1.msra.mxu0 0.0
    %1602 = vmatprep.subr.mxu0 0.0
    %1603 = vmatpush1.msra.mxu0 0.0
    %1604 = vmatprep.subr.mxu0 0.0
    %1605 = vmatpush1.msra.mxu0 0.0
    %1606 = vmatprep.subr.mxu0 0.0
    %1607 = vmatpush1.msra.mxu0 0.0
    %1608 = vmatprep.subr.mxu0 0.0
    %1609 = vmatpush1.msra.mxu0 0.0
    %1610 = vmatprep.subr.mxu0 0.0
    %1611 = vmatpush1.msra.mxu0 0.0
    %1612 = vmatprep.subr.mxu0 0.0
    %1613 = vmatpush1.msra.mxu0 0.0
    %1614 = vmatprep.subr.mxu0 0.0
    %1615 = vmatpush1.msra.mxu0 0.0
    %1616 = vmatprep.subr.mxu0 0.0
    %1617 = vmatpush1.msra.mxu0 0.0
    %1618 = vmatprep.subr.mxu0 0.0
    %1619 = vmatpush1.msra.mxu0 0.0
    %1620 = vmatprep.subr.mxu0 0.0
    %1621 = vmatpush1.msra.mxu0 0.0
    %1622 = vmatprep.subr.mxu0 0.0
    %1623 = vmatpush1.msra.mxu0 0.0
    %1624 = vmatprep.subr.mxu0 0.0
    %1625 = vmatpush1.msra.mxu0 0.0
    %1626 = vmatprep.subr.mxu0 0.0
    %1627 = vmatpush1.msra.mxu0 0.0
    %1628 = vmatprep.subr.mxu0 0.0
    %1629 = vmatpush1.msra.mxu0 0.0
    %1630 = vmatprep.subr.mxu0 0.0
    %1631 = vmatpush1.msra.mxu0 0.0
    %1632 = vmatprep.subr.mxu0 0.0
    %1633 = vmatpush1.msra.mxu0 0.0
    %1634 = vmatprep.subr.mxu0 0.0
    %1635 = vmatpush1.msra.mxu0 0.0
    %1636 = vmatprep.subr.mxu0 0.0
    %1637 = vmatpush1.msra.mxu0 0.0
    %1638 = vmatprep.subr.mxu0 0.0
    %1639 = vmatpush1.msra.mxu0 0.0
    %1640 = vmatprep.subr.mxu0 0.0
    %1641 = vmatpush1.msra.mxu0 0.0
    %1642 = vmatprep.subr.mxu0 0.0
    %1643 = vmatpush1.msra.mxu0 0.0
    %1644 = vmatprep.subr.mxu0 0.0
    %1645 = vmatpush1.msra.mxu0 0.0
    %1646 = vmatprep.mubr.f32.mxu0 0.0
    %1647 = vmatmul.mubr.f32.gmra.mrb[0].mxu0 %v1577
    %v1648 = vpop.f32.mrb[0].mxu0
    %v1649 = vadd.f32 %v1575, %v1648
    %v1650 = vpop.f32.mrb[0].mxu0
    %1651 = vmatprep.mubr.f32.mxu0 0.0
    %1652 = vmatmul.mubr.f32.gmra.mrb[0].mxu0 %v1580
    %v1653 = vpop.f32.mrb[0].mxu0
    %v1654 = vadd.f32 %v1575, %v1653
    %v1655 = vpop.f32.mrb[0].mxu0
    %1656 = vdwg.mxu0
    %v1657 = vadd.f32 %v1028, %v1649
    %v1658 = vadd.f32 %v1029, %v1654
    %v1659 = vld [vmem:[#allocation2 + $0x35e] sm:$0x1]
    %v1660 = vld [vmem:[#allocation2 + $0x35f] sm:$0x1]
    %v1661 = vsel %vm138, %v1657, 0.0
    %1662 = vadd.xlane.f32.xlu0 %v1661
    %v1663 = vpop.xlane.xlu0 %1662
    %v1664 = vsel %vm138, %v1658, 0.0
    %1665 = vadd.xlane.f32.xlu0 %v1664
    %v1666 = vpop.xlane.xlu0 %1665
    %v1667 = vmul.f32 %v1663, %v767
    %v1668 = vmul.f32 %v1666, %v767
    %v1669 = vsub.f32 %v1657, %v1667
    %v1670 = vsub.f32 %v1658, %v1668
    %v1671 = vmul.f32 %v1669, %v1669
    %v1672 = vmul.f32 %v1670, %v1670
    %v1673 = vsel %vm138, %v1671, 0.0
    %1674 = vadd.xlane.f32.xlu0 %v1673
    %v1675 = vpop.xlane.xlu0 %1674
    %v1676 = vsel %vm138, %v1672, 0.0
    %1677 = vadd.xlane.f32.xlu0 %v1676
    %v1678 = vpop.xlane.xlu0 %1677
    %v1679 = vmul.f32 %v1675, %v767
    %v1680 = vmul.f32 %v1678, %v767
    %v1681 = vadd.f32 %v1679, 1e-05
    %v1682 = vadd.f32 %v1680, 1e-05
    %v1683 = vrsqrt.pop %v1681
    %v1684 = vrsqrt.pop %v1682
    %v1685 = vmul.f32 %v1669, %v1683
    %v1686 = vmul.f32 %v1670, %v1684
    %v1687 = vlaneseq
    %v1688 = vshrl.u32 %v1687, 7
    %v1689 = vsub.s32 0, %v1688
    %v1690 = vrot.slane %v1659, %v1689
    %v1691 = vmul.f32 %v1685, %v1690
    %v1692 = vmul.f32 %v1686, %v1690
    %v1693 = vlaneseq
    %v1694 = vshrl.u32 %v1693, 7
    %v1695 = vsub.s32 0, %v1694
    %v1696 = vrot.slane %v1660, %v1695
    %v1697 = vadd.f32 %v1691, %v1696
    %v1698 = vadd.f32 %v1692, %v1696
    %v1699 = vld [vmem:[#allocation2 + $0x2b8] sm:$0xff]
    %v1700 = vld [vmem:[#allocation2 + $0x2c0] sm:$0xff]
    %v1701 = vld [vmem:[#allocation2 + $0x2c8] sm:$0xff]
    %v1702 = vld [vmem:[#allocation2 + $0x2d0] sm:$0xff]
    %v1703 = vld [vmem:[#allocation2 + $0x35c] sm:$0x1]
    %v1704 = vlaneseq
    %v1705 = vshrl.u32 %v1704, 7
    %v1706 = vsub.s32 0, %v1705
    %v1707 = vrot.slane %v1703, %v1706
    %v1709 = vsel %vm138, %v1697, 0
    %v1712 = vsel %vm138, %v1698, 0
    %1714 = vmatprep.subr.mxu0 0.0
    %1715 = vmatpush1.msra.mxu0 %v1699
    %1716 = vmatprep.subr.mxu0 0.0
    %1717 = vmatpush1.msra.mxu0 %v1700
    %1718 = vmatprep.subr.mxu0 0.0
    %1719 = vmatpush1.msra.mxu0 %v1701
    %1720 = vmatprep.subr.mxu0 0.0
    %1721 = vmatpush1.msra.mxu0 %v1702
    %1722 = vmatprep.subr.mxu0 0.0
    %1723 = vmatpush1.msra.mxu0 0.0
    %1724 = vmatprep.subr.mxu0 0.0
    %1725 = vmatpush1.msra.mxu0 0.0
    %1726 = vmatprep.subr.mxu0 0.0
    %1727 = vmatpush1.msra.mxu0 0.0
    %1728 = vmatprep.subr.mxu0 0.0
    %1729 = vmatpush1.msra.mxu0 0.0
    %1730 = vmatprep.subr.mxu0 0.0
    %1731 = vmatpush1.msra.mxu0 0.0
    %1732 = vmatprep.subr.mxu0 0.0
    %1733 = vmatpush1.msra.mxu0 0.0
    %1734 = vmatprep.subr.mxu0 0.0
    %1735 = vmatpush1.msra.mxu0 0.0
    %1736 = vmatprep.subr.mxu0 0.0
    %1737 = vmatpush1.msra.mxu0 0.0
    %1738 = vmatprep.subr.mxu0 0.0
    %1739 = vmatpush1.msra.mxu0 0.0
    %1740 = vmatprep.subr.mxu0 0.0
    %1741 = vmatpush1.msra.mxu0 0.0
    %1742 = vmatprep.subr.mxu0 0.0
    %1743 = vmatpush1.msra.mxu0 0.0
    %1744 = vmatprep.subr.mxu0 0.0
    %1745 = vmatpush1.msra.mxu0 0.0
    %1746 = vmatprep.subr.mxu0 0.0
    %1747 = vmatpush1.msra.mxu0 0.0
    %1748 = vmatprep.subr.mxu0 0.0
    %1749 = vmatpush1.msra.mxu0 0.0
    %1750 = vmatprep.subr.mxu0 0.0
    %1751 = vmatpush1.msra.mxu0 0.0
    %1752 = vmatprep.subr.mxu0 0.0
    %1753 = vmatpush1.msra.mxu0 0.0
    %1754 = vmatprep.subr.mxu0 0.0
    %1755 = vmatpush1.msra.mxu0 0.0
    %1756 = vmatprep.subr.mxu0 0.0
    %1757 = vmatpush1.msra.mxu0 0.0
    %1758 = vmatprep.subr.mxu0 0.0
    %1759 = vmatpush1.msra.mxu0 0.0
    %1760 = vmatprep.subr.mxu0 0.0
    %1761 = vmatpush1.msra.mxu0 0.0
    %1762 = vmatprep.subr.mxu0 0.0
    %1763 = vmatpush1.msra.mxu0 0.0
    %1764 = vmatprep.subr.mxu0 0.0
    %1765 = vmatpush1.msra.mxu0 0.0
    %1766 = vmatprep.subr.mxu0 0.0
    %1767 = vmatpush1.msra.mxu0 0.0
    %1768 = vmatprep.subr.mxu0 0.0
    %1769 = vmatpush1.msra.mxu0 0.0
    %1770 = vmatprep.subr.mxu0 0.0
    %1771 = vmatpush1.msra.mxu0 0.0
    %1772 = vmatprep.subr.mxu0 0.0
    %1773 = vmatpush1.msra.mxu0 0.0
    %1774 = vmatprep.subr.mxu0 0.0
    %1775 = vmatpush1.msra.mxu0 0.0
    %1776 = vmatprep.subr.mxu0 0.0
    %1777 = vmatpush1.msra.mxu0 0.0
    %1778 = vmatprep.mubr.f32.mxu0 0.0
    %1779 = vmatmul.mubr.f32.gmra.mrb[0].mxu0 %v1709
    %v1780 = vpop.f32.mrb[0].mxu0
    %v1781 = vadd.f32 %v1707, %v1780
    %v1782 = vpop.f32.mrb[0].mxu0
    %1783 = vmatprep.mubr.f32.mxu0 0.0
    %1784 = vmatmul.mubr.f32.gmra.mrb[0].mxu0 %v1712
    %v1785 = vpop.f32.mrb[0].mxu0
    %v1786 = vadd.f32 %v1707, %v1785
    %v1787 = vpop.f32.mrb[0].mxu0
    %1788 = vdwg.mxu0
    %v1789 = vmax.f32 %v1781, 0.0
    %v1790 = vmax.f32 %v1786, 0.0
    %v1791 = vld [vmem:[#allocation2 + $0x2d8] sm:$0xff]
    %v1792 = vld [vmem:[#allocation2 + $0x2e0] sm:$0xff]
    %v1793 = vld [vmem:[#allocation2 + $0x2e8] sm:$0xff]
    %v1794 = vld [vmem:[#allocation2 + $0x2f0] sm:$0xff]
    %v1795 = vld [vmem:[#allocation2 + $0x2f8] sm:$0xff]
    %v1796 = vld [vmem:[#allocation2 + $0x300] sm:$0xff]
    %v1797 = vld [vmem:[#allocation2 + $0x308] sm:$0xff]
    %v1798 = vld [vmem:[#allocation2 + $0x310] sm:$0xff]
    %v1799 = vld [vmem:[#allocation2 + $0x318] sm:$0xff]
    %v1800 = vld [vmem:[#allocation2 + $0x320] sm:$0xff]
    %v1801 = vld [vmem:[#allocation2 + $0x328] sm:$0xff]
    %v1802 = vld [vmem:[#allocation2 + $0x330] sm:$0xff]
    %v1803 = vld [vmem:[#allocation2 + $0x338] sm:$0xff]
    %v1804 = vld [vmem:[#allocation2 + $0x340] sm:$0xff]
    %v1805 = vld [vmem:[#allocation2 + $0x348] sm:$0xff]
    %v1806 = vld [vmem:[#allocation2 + $0x350] sm:$0xff]
    %v1807 = vld [vmem:[#allocation2 + $0x35d] sm:$0x1]
    %v1808 = vlaneseq
    %v1809 = vshrl.u32 %v1808, 7
    %v1810 = vsub.s32 0, %v1809
    %v1811 = vrot.slane %v1807, %v1810
    %1812 = vmatprep.subr.mxu0 0.0
    %1813 = vmatpush1.msra.mxu0 %v1791
    %1814 = vmatprep.subr.mxu0 0.0
    %1815 = vmatpush1.msra.mxu0 %v1792
    %1816 = vmatprep.subr.mxu0 0.0
    %1817 = vmatpush1.msra.mxu0 %v1793
    %1818 = vmatprep.subr.mxu0 0.0
    %1819 = vmatpush1.msra.mxu0 %v1794
    %1820 = vmatprep.subr.mxu0 0.0
    %1821 = vmatpush1.msra.mxu0 %v1795
    %1822 = vmatprep.subr.mxu0 0.0
    %1823 = vmatpush1.msra.mxu0 %v1796
    %1824 = vmatprep.subr.mxu0 0.0
    %1825 = vmatpush1.msra.mxu0 %v1797
    %1826 = vmatprep.subr.mxu0 0.0
    %1827 = vmatpush1.msra.mxu0 %v1798
    %1828 = vmatprep.subr.mxu0 0.0
    %1829 = vmatpush1.msra.mxu0 %v1799
    %1830 = vmatprep.subr.mxu0 0.0
    %1831 = vmatpush1.msra.mxu0 %v1800
    %1832 = vmatprep.subr.mxu0 0.0
    %1833 = vmatpush1.msra.mxu0 %v1801
    %1834 = vmatprep.subr.mxu0 0.0
    %1835 = vmatpush1.msra.mxu0 %v1802
    %1836 = vmatprep.subr.mxu0 0.0
    %1837 = vmatpush1.msra.mxu0 %v1803
    %1838 = vmatprep.subr.mxu0 0.0
    %1839 = vmatpush1.msra.mxu0 %v1804
    %1840 = vmatprep.subr.mxu0 0.0
    %1841 = vmatpush1.msra.mxu0 %v1805
    %1842 = vmatprep.subr.mxu0 0.0
    %1843 = vmatpush1.msra.mxu0 %v1806
    %1844 = vmatprep.subr.mxu0 0.0
    %1845 = vmatpush1.msra.mxu0 0.0
    %1846 = vmatprep.subr.mxu0 0.0
    %1847 = vmatpush1.msra.mxu0 0.0
    %1848 = vmatprep.subr.mxu0 0.0
    %1849 = vmatpush1.msra.mxu0 0.0
    %1850 = vmatprep.subr.mxu0 0.0
    %1851 = vmatpush1.msra.mxu0 0.0
    %1852 = vmatprep.subr.mxu0 0.0
    %1853 = vmatpush1.msra.mxu0 0.0
    %1854 = vmatprep.subr.mxu0 0.0
    %1855 = vmatpush1.msra.mxu0 0.0
    %1856 = vmatprep.subr.mxu0 0.0
    %1857 = vmatpush1.msra.mxu0 0.0
    %1858 = vmatprep.subr.mxu0 0.0
    %1859 = vmatpush1.msra.mxu0 0.0
    %1860 = vmatprep.subr.mxu0 0.0
    %1861 = vmatpush1.msra.mxu0 0.0
    %1862 = vmatprep.subr.mxu0 0.0
    %1863 = vmatpush1.msra.mxu0 0.0
    %1864 = vmatprep.subr.mxu0 0.0
    %1865 = vmatpush1.msra.mxu0 0.0
    %1866 = vmatprep.subr.mxu0 0.0
    %1867 = vmatpush1.msra.mxu0 0.0
    %1868 = vmatprep.subr.mxu0 0.0
    %1869 = vmatpush1.msra.mxu0 0.0
    %1870 = vmatprep.subr.mxu0 0.0
    %1871 = vmatpush1.msra.mxu0 0.0
    %1872 = vmatprep.subr.mxu0 0.0
    %1873 = vmatpush1.msra.mxu0 0.0
    %1874 = vmatprep.subr.mxu0 0.0
    %1875 = vmatpush1.msra.mxu0 0.0
    %1876 = vmatprep.mubr.f32.mxu0 0.0
    %1877 = vmatmul.mubr.f32.gmra.mrb[0].mxu0 %v1789
    %v1878 = vpop.f32.mrb[0].mxu0
    %v1879 = vadd.f32 %v1811, %v1878
    %v1880 = vpop.f32.mrb[0].mxu0
    %1881 = vmatprep.mubr.f32.mxu0 0.0
    %1882 = vmatmul.mubr.f32.gmra.mrb[0].mxu0 %v1790
    %v1883 = vpop.f32.mrb[0].mxu0
    %v1884 = vadd.f32 %v1811, %v1883
    %v1885 = vpop.f32.mrb[0].mxu0
    %1886 = vdwg.mxu0
    %v1887 = vadd.f32 %v1697, %v1879
    %v1888 = vadd.f32 %v1698, %v1884
    %v1889 = vld [vmem:[#allocation2 + $0x360] sm:$0x1]
    %v1890 = vld [vmem:[#allocation2 + $0x361] sm:$0x1]
    %v1891 = vsel %vm138, %v1887, 0.0
    %1892 = vadd.xlane.f32.xlu0 %v1891
    %v1893 = vpop.xlane.xlu0 %1892
    %v1894 = vsel %vm138, %v1888, 0.0
    %1895 = vadd.xlane.f32.xlu0 %v1894
    %v1896 = vpop.xlane.xlu0 %1895
    %v1897 = vmul.f32 %v1893, %v767
    %v1898 = vmul.f32 %v1896, %v767
    %v1899 = vsub.f32 %v1887, %v1897
    %v1900 = vsub.f32 %v1888, %v1898
    %v1901 = vmul.f32 %v1899, %v1899
    %v1902 = vmul.f32 %v1900, %v1900
    %v1903 = vsel %vm138, %v1901, 0.0
    %1904 = vadd.xlane.f32.xlu0 %v1903
    %v1905 = vpop.xlane.xlu0 %1904
    %v1906 = vsel %vm138, %v1902, 0.0
    %1907 = vadd.xlane.f32.xlu0 %v1906
    %v1908 = vpop.xlane.xlu0 %1907
    %v1909 = vmul.f32 %v1905, %v767
    %v1910 = vmul.f32 %v1908, %v767
    %v1911 = vadd.f32 %v1909, 1e-05
    %v1912 = vadd.f32 %v1910, 1e-05
    %v1913 = vrsqrt.pop %v1911
    %v1914 = vrsqrt.pop %v1912
    %v1915 = vmul.f32 %v1899, %v1913
    %v1916 = vmul.f32 %v1900, %v1914
    %v1917 = vlaneseq
    %v1918 = vshrl.u32 %v1917, 7
    %v1919 = vsub.s32 0, %v1918
    %v1920 = vrot.slane %v1889, %v1919
    %v1921 = vmul.f32 %v1915, %v1920
    %v1922 = vmul.f32 %v1916, %v1920
    %v1923 = vlaneseq
    %v1924 = vshrl.u32 %v1923, 7
    %v1925 = vsub.s32 0, %v1924
    %v1926 = vrot.slane %v1890, %v1925
    %v1927 = vadd.f32 %v1921, %v1926
    %v1928 = vadd.f32 %v1922, %v1926
    %v1929 = vld [vmem:[#allocation2 + $0xf0] sm:$0xff]
    %vm1930 = vcmask 130048
    %v1932 = vsel %vm1930, %v1929, 0
    %1934 = vmatprep.subr.mxu0 0.0
    %1935 = vmatpush1.msra.mxu0 %v1927
    %1936 = vmatprep.subr.mxu0 0.0
    %1937 = vmatpush1.msra.mxu0 %v1928
    %1938 = vmatprep.subr.mxu0 0.0
    %1939 = vmatpush1.msra.mxu0 0.0
    %1940 = vmatprep.subr.mxu0 0.0
    %1941 = vmatpush1.msra.mxu0 0.0
    %1942 = vmatprep.subr.mxu0 0.0
    %1943 = vmatpush1.msra.mxu0 0.0
    %1944 = vmatprep.subr.mxu0 0.0
    %1945 = vmatpush1.msra.mxu0 0.0
    %1946 = vmatprep.subr.mxu0 0.0
    %1947 = vmatpush1.msra.mxu0 0.0
    %1948 = vmatprep.subr.mxu0 0.0
    %1949 = vmatpush1.msra.mxu0 0.0
    %1950 = vmatprep.subr.mxu0 0.0
    %1951 = vmatpush1.msra.mxu0 0.0
    %1952 = vmatprep.subr.mxu0 0.0
    %1953 = vmatpush1.msra.mxu0 0.0
    %1954 = vmatprep.subr.mxu0 0.0
    %1955 = vmatpush1.msra.mxu0 0.0
    %1956 = vmatprep.subr.mxu0 0.0
    %1957 = vmatpush1.msra.mxu0 0.0
    %1958 = vmatprep.subr.mxu0 0.0
    %1959 = vmatpush1.msra.mxu0 0.0
    %1960 = vmatprep.subr.mxu0 0.0
    %1961 = vmatpush1.msra.mxu0 0.0
    %1962 = vmatprep.subr.mxu0 0.0
    %1963 = vmatpush1.msra.mxu0 0.0
    %1964 = vmatprep.subr.mxu0 0.0
    %1965 = vmatpush1.msra.mxu0 0.0
    %1966 = vmatprep.subr.mxu0 0.0
    %1967 = vmatpush1.msra.mxu0 0.0
    %1968 = vmatprep.subr.mxu0 0.0
    %1969 = vmatpush1.msra.mxu0 0.0
    %1970 = vmatprep.subr.mxu0 0.0
    %1971 = vmatpush1.msra.mxu0 0.0
    %1972 = vmatprep.subr.mxu0 0.0
    %1973 = vmatpush1.msra.mxu0 0.0
    %1974 = vmatprep.subr.mxu0 0.0
    %1975 = vmatpush1.msra.mxu0 0.0
    %1976 = vmatprep.subr.mxu0 0.0
    %1977 = vmatpush1.msra.mxu0 0.0
    %1978 = vmatprep.subr.mxu0 0.0
    %1979 = vmatpush1.msra.mxu0 0.0
    %1980 = vmatprep.subr.mxu0 0.0
    %1981 = vmatpush1.msra.mxu0 0.0
    %1982 = vmatprep.subr.mxu0 0.0
    %1983 = vmatpush1.msra.mxu0 0.0
    %1984 = vmatprep.subr.mxu0 0.0
    %1985 = vmatpush1.msra.mxu0 0.0
    %1986 = vmatprep.subr.mxu0 0.0
    %1987 = vmatpush1.msra.mxu0 0.0
    %1988 = vmatprep.subr.mxu0 0.0
    %1989 = vmatpush1.msra.mxu0 0.0
    %1990 = vmatprep.subr.mxu0 0.0
    %1991 = vmatpush1.msra.mxu0 0.0
    %1992 = vmatprep.subr.mxu0 0.0
    %1993 = vmatpush1.msra.mxu0 0.0
    %1994 = vmatprep.subr.mxu0 0.0
    %1995 = vmatpush1.msra.mxu0 0.0
    %1996 = vmatprep.subr.mxu0 0.0
    %1997 = vmatpush1.msra.mxu0 0.0
    %1998 = vmatprep.mubr.f32.mxu0 0.0
    %1999 = vmatmul.mubr.f32.gmra.mrb[0].mxu0 %v1932
    %v2000 = vpop.f32.mrb[0].mxu0
    %v2001 = vadd.f32 0.0, %v2000
    %v2002 = vpop.f32.mrb[0].mxu0
    %2003 = vdwg.mxu0
    %v2004 = vld [vmem:[#allocation2 + $0x80] sm:$0xff]
    %v2005 = vld [vmem:[#allocation2 + $0x88] sm:$0xff]
    %v2006 = vld [vmem:[#allocation2 + $0x90] sm:$0xff]
    %v2007 = vld [vmem:[#allocation2 + $0x98] sm:$0xff]
    %v2008 = vld [vmem:[#allocation2 + $0xf9] sm:$0x1]
    %v2009 = vlaneseq
    %v2010 = vshrl.u32 %v2009, 7
    %v2011 = vsub.s32 0, %v2010
    %v2012 = vrot.slane %v2008, %v2011
    %v2014 = vsel %vm138, %v2001, 0
    %2016 = vmatprep.subr.mxu0 0.0
    %2017 = vmatpush1.msra.mxu0 %v2004
    %2018 = vmatprep.subr.mxu0 0.0
    %2019 = vmatpush1.msra.mxu0 %v2005
    %2020 = vmatprep.subr.mxu0 0.0
    %2021 = vmatpush1.msra.mxu0 %v2006
    %2022 = vmatprep.subr.mxu0 0.0
    %2023 = vmatpush1.msra.mxu0 %v2007
    %2024 = vmatprep.subr.mxu0 0.0
    %2025 = vmatpush1.msra.mxu0 0.0
    %2026 = vmatprep.subr.mxu0 0.0
    %2027 = vmatpush1.msra.mxu0 0.0
    %2028 = vmatprep.subr.mxu0 0.0
    %2029 = vmatpush1.msra.mxu0 0.0
    %2030 = vmatprep.subr.mxu0 0.0
    %2031 = vmatpush1.msra.mxu0 0.0
    %2032 = vmatprep.subr.mxu0 0.0
    %2033 = vmatpush1.msra.mxu0 0.0
    %2034 = vmatprep.subr.mxu0 0.0
    %2035 = vmatpush1.msra.mxu0 0.0
    %2036 = vmatprep.subr.mxu0 0.0
    %2037 = vmatpush1.msra.mxu0 0.0
    %2038 = vmatprep.subr.mxu0 0.0
    %2039 = vmatpush1.msra.mxu0 0.0
    %2040 = vmatprep.subr.mxu0 0.0
    %2041 = vmatpush1.msra.mxu0 0.0
    %2042 = vmatprep.subr.mxu0 0.0
    %2043 = vmatpush1.msra.mxu0 0.0
    %2044 = vmatprep.subr.mxu0 0.0
    %2045 = vmatpush1.msra.mxu0 0.0
    %2046 = vmatprep.subr.mxu0 0.0
    %2047 = vmatpush1.msra.mxu0 0.0
    %2048 = vmatprep.subr.mxu0 0.0
    %2049 = vmatpush1.msra.mxu0 0.0
    %2050 = vmatprep.subr.mxu0 0.0
    %2051 = vmatpush1.msra.mxu0 0.0
    %2052 = vmatprep.subr.mxu0 0.0
    %2053 = vmatpush1.msra.mxu0 0.0
    %2054 = vmatprep.subr.mxu0 0.0
    %2055 = vmatpush1.msra.mxu0 0.0
    %2056 = vmatprep.subr.mxu0 0.0
    %2057 = vmatpush1.msra.mxu0 0.0
    %2058 = vmatprep.subr.mxu0 0.0
    %2059 = vmatpush1.msra.mxu0 0.0
    %2060 = vmatprep.subr.mxu0 0.0
    %2061 = vmatpush1.msra.mxu0 0.0
    %2062 = vmatprep.subr.mxu0 0.0
    %2063 = vmatpush1.msra.mxu0 0.0
    %2064 = vmatprep.subr.mxu0 0.0
    %2065 = vmatpush1.msra.mxu0 0.0
    %2066 = vmatprep.subr.mxu0 0.0
    %2067 = vmatpush1.msra.mxu0 0.0
    %2068 = vmatprep.subr.mxu0 0.0
    %2069 = vmatpush1.msra.mxu0 0.0
    %2070 = vmatprep.subr.mxu0 0.0
    %2071 = vmatpush1.msra.mxu0 0.0
    %2072 = vmatprep.subr.mxu0 0.0
    %2073 = vmatpush1.msra.mxu0 0.0
    %2074 = vmatprep.subr.mxu0 0.0
    %2075 = vmatpush1.msra.mxu0 0.0
    %2076 = vmatprep.subr.mxu0 0.0
    %2077 = vmatpush1.msra.mxu0 0.0
    %2078 = vmatprep.subr.mxu0 0.0
    %2079 = vmatpush1.msra.mxu0 0.0
    %2080 = vmatprep.mubr.f32.mxu0 0.0
    %2081 = vmatmul.mubr.f32.gmra.mrb[0].mxu0 %v2014
    %v2082 = vpop.f32.mrb[0].mxu0
    %v2083 = vadd.f32 %v2012, %v2082
    %v2084 = vpop.f32.mrb[0].mxu0
    %2085 = vdwg.mxu0
    %v2086 = vld [vmem:[#allocation2 + $0xfa] sm:$0x1]
    %v2087 = vld [vmem:[#allocation2 + $0xfb] sm:$0x1]
    %v2088 = vsel %vm138, %v2083, 0.0
    %2089 = vadd.xlane.f32.xlu0 %v2088
    %v2090 = vpop.xlane.xlu0 %2089
    %v2091 = vmul.f32 %v2090, %v767
    %v2092 = vsub.f32 %v2083, %v2091
    %v2093 = vmul.f32 %v2092, %v2092
    %v2094 = vsel %vm138, %v2093, 0.0
    %2095 = vadd.xlane.f32.xlu0 %v2094
    %v2096 = vpop.xlane.xlu0 %2095
    %v2097 = vmul.f32 %v2096, %v767
    %v2098 = vadd.f32 %v2097, 1e-05
    %v2099 = vrsqrt.pop %v2098
    %v2100 = vmul.f32 %v2092, %v2099
    %v2101 = vlaneseq
    %v2102 = vshrl.u32 %v2101, 7
    %v2103 = vsub.s32 0, %v2102
    %v2104 = vrot.slane %v2086, %v2103
    %v2105 = vmul.f32 %v2100, %v2104
    %v2106 = vlaneseq
    %v2107 = vshrl.u32 %v2106, 7
    %v2108 = vsub.s32 0, %v2107
    %v2109 = vrot.slane %v2087, %v2108
    %v2110 = vadd.f32 %v2105, %v2109
    %v2111 = vld [vmem:[#allocation2 + $0xa0] sm:$0xff]
    %v2112 = vld [vmem:[#allocation2 + $0xa8] sm:$0xff]
    %v2113 = vld [vmem:[#allocation2 + $0xb0] sm:$0xff]
    %v2114 = vld [vmem:[#allocation2 + $0xb8] sm:$0xff]
    %v2116 = vsel %vm138, %v2110, 0
    %2118 = vmatprep.subr.mxu0 0.0
    %2119 = vmatpush1.msra.mxu0 %v2111
    %2120 = vmatprep.subr.mxu0 0.0
    %2121 = vmatpush1.msra.mxu0 %v2112
    %2122 = vmatprep.subr.mxu0 0.0
    %2123 = vmatpush1.msra.mxu0 %v2113
    %2124 = vmatprep.subr.mxu0 0.0
    %2125 = vmatpush1.msra.mxu0 %v2114
    %2126 = vmatprep.subr.mxu0 0.0
    %2127 = vmatpush1.msra.mxu0 0.0
    %2128 = vmatprep.subr.mxu0 0.0
    %2129 = vmatpush1.msra.mxu0 0.0
    %2130 = vmatprep.subr.mxu0 0.0
    %2131 = vmatpush1.msra.mxu0 0.0
    %2132 = vmatprep.subr.mxu0 0.0
    %2133 = vmatpush1.msra.mxu0 0.0
    %2134 = vmatprep.subr.mxu0 0.0
    %2135 = vmatpush1.msra.mxu0 0.0
    %2136 = vmatprep.subr.mxu0 0.0
    %2137 = vmatpush1.msra.mxu0 0.0
    %2138 = vmatprep.subr.mxu0 0.0
    %2139 = vmatpush1.msra.mxu0 0.0
    %2140 = vmatprep.subr.mxu0 0.0
    %2141 = vmatpush1.msra.mxu0 0.0
    %2142 = vmatprep.subr.mxu0 0.0
    %2143 = vmatpush1.msra.mxu0 0.0
    %2144 = vmatprep.subr.mxu0 0.0
    %2145 = vmatpush1.msra.mxu0 0.0
    %2146 = vmatprep.subr.mxu0 0.0
    %2147 = vmatpush1.msra.mxu0 0.0
    %2148 = vmatprep.subr.mxu0 0.0
    %2149 = vmatpush1.msra.mxu0 0.0
    %2150 = vmatprep.subr.mxu0 0.0
    %2151 = vmatpush1.msra.mxu0 0.0
    %2152 = vmatprep.subr.mxu0 0.0
    %2153 = vmatpush1.msra.mxu0 0.0
    %2154 = vmatprep.subr.mxu0 0.0
    %2155 = vmatpush1.msra.mxu0 0.0
    %2156 = vmatprep.subr.mxu0 0.0
    %2157 = vmatpush1.msra.mxu0 0.0
    %2158 = vmatprep.subr.mxu0 0.0
    %2159 = vmatpush1.msra.mxu0 0.0
    %2160 = vmatprep.subr.mxu0 0.0
    %2161 = vmatpush1.msra.mxu0 0.0
    %2162 = vmatprep.subr.mxu0 0.0
    %2163 = vmatpush1.msra.mxu0 0.0
    %2164 = vmatprep.subr.mxu0 0.0
    %2165 = vmatpush1.msra.mxu0 0.0
    %2166 = vmatprep.subr.mxu0 0.0
    %2167 = vmatpush1.msra.mxu0 0.0
    %2168 = vmatprep.subr.mxu0 0.0
    %2169 = vmatpush1.msra.mxu0 0.0
    %2170 = vmatprep.subr.mxu0 0.0
    %2171 = vmatpush1.msra.mxu0 0.0
    %2172 = vmatprep.subr.mxu0 0.0
    %2173 = vmatpush1.msra.mxu0 0.0
    %2174 = vmatprep.subr.mxu0 0.0
    %2175 = vmatpush1.msra.mxu0 0.0
    %2176 = vmatprep.subr.mxu0 0.0
    %2177 = vmatpush1.msra.mxu0 0.0
    %2178 = vmatprep.subr.mxu0 0.0
    %2179 = vmatpush1.msra.mxu0 0.0
    %2180 = vmatprep.subr.mxu0 0.0
    %2181 = vmatpush1.msra.mxu0 0.0
    %2182 = vmatprep.mubr.f32.mxu0 0.0
    %2183 = vmatmul.mubr.f32.gmra.mrb[0].mxu0 %v2116
    %v2184 = vpop.f32.mrb[0].mxu0
    %v2185 = vadd.f32 0.0, %v2184
    %v2186 = vpop.f32.mrb[0].mxu0
    %2187 = vdwg.mxu0
    %v2188 = vmul.f32 %v2110, %v2110
    %v2189 = vsel %vm138, %v2188, 0.0
    %2190 = vadd.xlane.f32.xlu0 %v2189
    %v2191 = vpop.xlane.xlu0 %2190
    %v2192 = vld [vmem:[#allocation2 + $0xfc] sm:$0x1]
    %v2193 = vlaneseq
    %v2194 = vshrl.u32 %v2193, 7
    %v2195 = vsub.s32 0, %v2194
    %v2196 = vrot.slane %v2192, %v2195
    %v2197 = vadd.f32 %v2191, %v2196
    %v2198 = vmul.f32 %v2185, 2.0
    %v2199 = vsub.f32 %v2197, %v2198
    %v2200 = vmax.f32 %v2199, 0.0
    %v2201 = vrsqrt.pop %v2200
    %v2202 = vmul.f32 %v2200, %v2201
    %vm2203 = vcmp.eq.f32.partialorder %v2200, inf
    %v2204 = vsel %vm2203, %v2200, %v2202
    %vm2205 = vcmp.eq.f32.partialorder %v2200, 0.0
    %v2206 = vand.u32 %v2200, 2147483648
    %v2207 = vsel %vm2205, %v2206, %v2204
    %v2208 = vld [vmem:[#allocation2 + $0xfe] sm:$0x1]
    %v2209 = vlaneseq
    %v2210 = vshrl.u32 %v2209, 7
    %v2211 = vsub.s32 0, %v2210
    %v2212 = vrot.slane %v2208, %v2211
    %v2213 = vmul.f32 %v2207, %v2212
    %v2214 = vmul.f32 %v2213, 2.236068
    %v2215 = vadd.f32 %v2214, 1.0
    %v2216 = vmul.f32 %v2213, %v2213
    %v2217 = vmul.f32 %v2216, 1.6666666
    %v2218 = vadd.f32 %v2215, %v2217
    %v2219 = vmul.f32 %v2213, -2.236068
    %v2220 = vmul.f32 %v2219, 1.442695
    %v2221 = vpow.pop %v2220
    %v2222 = vmul.f32 %v2218, %v2221
    %v2223 = vsub.f32 0.0, %v2200
    %v2224 = vld [vmem:[#allocation2 + $0xff] sm:$0x1]
    %v2225 = vlaneseq
    %v2226 = vshrl.u32 %v2225, 7
    %v2227 = vsub.s32 0, %v2226
    %v2228 = vrot.slane %v2224, %v2227
    %v2229 = vmul.f32 %v2223, %v2228
    %v2230 = vmul.f32 %v2229, 1.442695
    %v2231 = vpow.pop %v2230
    %v2232 = vadd.f32 %v2222, %v2231
    %v2233 = vld [vmem:[#allocation2 + $0xfd] sm:$0x1]
    %v2234 = vlaneseq
    %v2235 = vshrl.u32 %v2234, 7
    %v2236 = vsub.s32 0, %v2235
    %v2237 = vrot.slane %v2233, %v2236
    %v2238 = vmul.f32 %v2232, %v2237
    %2239 = vadd.xlane.f32.xlu0 %v2238
    %v2240 = vpop.xlane.xlu0 %2239
    %v2241 = vld [vmem:[#allocation2 + $0x100] sm:$0x1]
    %v2242 = vlaneseq
    %v2243 = vshrl.u32 %v2242, 7
    %v2244 = vsub.s32 0, %v2243
    %v2245 = vrot.slane %v2241, %v2244
    %v2246 = vadd.f32 %v2240, %v2245
    %2247 = vst [vmem:[%s2] sm:$0xff] %v2246
    // Predicated region
    $region14: #{residual_model_svgp_forward.1} parent=1 // pred_check
      _
    $region15: #{residual_model_svgp_forward.1} parent=1 // pred_check_branch
      %2249 = sbr.rel (0) target = $region17
    $region16: #{residual_model_svgp_forward.1} parent=1 // pred_region
      _
    $region17: #{residual_model_svgp_forward.1} parent=1 // pred_fallthru
      _
    // Predicated region
    $region18: #{residual_model_svgp_forward.1} parent=1 // pred_check
      _
    $region19: #{residual_model_svgp_forward.1} parent=1 // pred_check_branch
      %2251 = sbr.rel (0) target = $region21
    $region20: #{residual_model_svgp_forward.1} parent=1 // pred_region
      _
    $region21: #{residual_model_svgp_forward.1} parent=1 // pred_fallthru
      _
    %2252 = vsyncpa [#allocation3], 1

</llo_original>
